<compile_context>
chip_gen: v5e
topology: v5e:2x2
jax: 0.10.0
libtpu: 0.0.40
codegen_flags: <defaults>
</compile_context>

<pallas_src>
import functools

import jax
import jax.numpy as jnp
from jax.experimental import pallas as pl
from jax.experimental.pallas import tpu as pltpu

# Layer widths of the PyTorch module: 32->64->128->256->512->256->128->12
DIMS = [32, 64, 128, 256, 512, 256, 128, 12]
NEG_SLOPE = 0.01        # F.leaky_relu default
OUT_PAD = 16            # last layer rows padded 12 -> 16 (one sublane group)
_SPLIT_MIN_ROWS = 256   # min rows/tile when force-splitting for 2-TC chips


def _round_up(x, m):
    return ((x + m - 1) // m) * m


def _cdiv(a, b):
    return -(-a // b)


def _device_flags():
    """(elementwise_bf16, two_tensorcores) from the local TPU generation."""
    try:
        kind = jax.devices()[0].device_kind.lower()
    except Exception:  # pragma: no cover - should not happen on TPU
        kind = ""
    elementwise_bf16 = "v5" not in kind   # v5e/v5p: keep elementwise in f32
    two_tensorcores = "v7" in kind        # v7x: 2 TensorCores per chip
    return elementwise_bf16, two_tensorcores


def linear_decoder_kernel(x_ref,
                          w0, b0, w1, b1, w2, b2, w3, b3,
                          w4, b4, w5, b5, w6, b6,
                          o_ref, *, elementwise_bf16):
    """Fused 7-layer MLP.  Output stored transposed: o_ref is (16, tile)."""
    ws = (w0, w1, w2, w3, w4, w5)
    bs = (b0, b1, b2, b3, b4, b5)
    h = x_ref[...].astype(jnp.bfloat16)                    # (tile, 32) bf16 operand
    for i in range(len(ws)):
        # bf16 operands on the MXU, f32 accumulation.
        acc = jnp.dot(h, ws[i][...], preferred_element_type=jnp.float32)
        acc = acc + bs[i][...]                             # f32 bias add (accuracy)
        if elementwise_bf16:
            # leaky_relu in bf16 (v6e/v7x bf16 VPU path), feeds next dot directly.
            a = acc.astype(jnp.bfloat16)
            h = jnp.where(a > 0, a, a * jnp.bfloat16(NEG_SLOPE))
        else:
            # v5e: keep elementwise in f32, cast once before the next dot.
            acc = jnp.where(acc > 0, acc, NEG_SLOPE * acc)
            h = acc.astype(jnp.bfloat16)
    # Last layer computed transposed: (16, tile) = W_last(16,128) @ h(tile,128)^T
    # (both operands contract on their last dim -> native MXU A @ B^T pattern).
    out_t = jax.lax.dot_general(w6[...], h, (((1,), (1,)), ((), ())),
                                preferred_element_type=jnp.float32)
    out_t = out_t + b6[...]                                # (16, 1) f32 bias
    o_ref[...] = out_t.astype(o_ref.dtype)                 # lane-dense (16, tile) store


def _prepare_params(params):
    """Cast weights to bf16; last layer stored transposed & padded 12->16 rows."""
    prepped = []
    n = len(params)
    for i, (w, b) in enumerate(params):
        if i == n - 1:
            # w: (128, 12) -> W^T padded: (16, 128); b: (1, 12) -> (16, 1)
            wt = jnp.pad(w.T, ((0, OUT_PAD - w.shape[1]), (0, 0))).astype(jnp.bfloat16)
            bt = jnp.pad(b.reshape(-1, 1),
                         ((0, OUT_PAD - b.size), (0, 0))).astype(jnp.float32)
            prepped.append((wt, bt))
        else:
            prepped.append((w.astype(jnp.bfloat16), b.astype(jnp.float32)))
    return prepped


def linear_decoder(code, params, *, batch_tile=1024):
    """code: f32[B, 32]; params: list of (W[in,out] f32, b[1,out] f32) -> f32[B, 12]."""
    B, d_in = code.shape
    assert d_in == DIMS[0]
    d_out = DIMS[-1]

    elementwise_bf16, two_tc = _device_flags()

    # Grid-step / tile selection: minimize padding, amortize per-step overhead.
    num_steps = max(1, _cdiv(B, batch_tile))
    # On 2-TC chips keep >= 2 grid steps for mid/large batches so both cores work.
    if two_tc and num_steps == 1 and B >= 2 * _SPLIT_MIN_ROWS:
        num_steps = 2
    # When grid > 1 the batch axis is the output's lane dim -> tile must be a
    # multiple of 128 for lane-dense stores; a single step only needs sublane (8).
    granule = 128 if num_steps > 1 else 8
    tile = _round_up(_cdiv(B, num_steps), granule)
    Bp = num_steps * tile
    if Bp != B:
        code = jnp.pad(code, ((0, Bp - B), (0, 0)))

    prepped = _prepare_params(params)

    flat_args = [code]
    in_specs = [pl.BlockSpec((tile, d_in), lambda i: (i, 0))]
    for (w, b) in prepped:
        flat_args += [w, b]
        # Weights / biases: whole arrays, single-buffered, resident in VMEM.
        in_specs += [pl.BlockSpec(memory_space=pltpu.MemorySpace.VMEM),
                     pl.BlockSpec(memory_space=pltpu.MemorySpace.VMEM)]

    # Transposed, lane-dense output block (16, tile) of the (16, Bp) slab.
    out_spec = pl.BlockSpec((OUT_PAD, tile), lambda i: (0, i))

    flops = 2 * Bp * sum(DIMS[i] * DIMS[i + 1] for i in range(len(DIMS) - 1))
    bytes_accessed = (Bp * d_in * 4
                      + sum(w.size * 2 + b.size * 4 for (w, b) in prepped)
                      + OUT_PAD * Bp * 4)

    kernel = functools.partial(linear_decoder_kernel,
                               elementwise_bf16=elementwise_bf16)

    out_t = pl.pallas_call(
        kernel,
        out_shape=jax.ShapeDtypeStruct((OUT_PAD, Bp), jnp.float32),
        grid_spec=pltpu.PrefetchScalarGridSpec(
            num_scalar_prefetch=0,
            grid=(num_steps,),
            in_specs=in_specs,
            out_specs=out_spec,
        ),
        compiler_params=pltpu.CompilerParams(
            dimension_semantics=("parallel",),   # shards grid across TCs on v7x
        ),
        cost_estimate=pl.CostEstimate(
            flops=flops, transcendentals=0, bytes_accessed=bytes_accessed),
    )(*flat_args)

    # (16, Bp) -> (B, 12): tiny slice + transpose (vs old 128-lane f32 pad+slice).
    return out_t[:d_out, :B].T


def init_params(key):
    """Deterministic synthetic parameters (PyTorch-style U(-1/sqrt(fan_in), ...))."""
    params = []
    for i in range(len(DIMS) - 1):
        fan_in, fan_out = DIMS[i], DIMS[i + 1]
        key, kw, kb = jax.random.split(key, 3)
        bound = 1.0 / jnp.sqrt(jnp.float32(fan_in))
        # Stored already transposed: [in, out]  (PyTorch nn.Linear stores [out, in])
        w = jax.random.uniform(kw, (fan_in, fan_out), jnp.float32, -bound, bound)
        b = jax.random.uniform(kb, (1, fan_out), jnp.float32, -bound, bound)
        params.append((w, b))
    return params


def reference_f32(code, params):
    out = code
    n = len(params)
    for i, (w, b) in enumerate(params):
        out = out @ w + b
        if i < n - 1:
            out = jnp.where(out > 0, out, NEG_SLOPE * out)
    return out


def reference_lowprec(code, params, elementwise_bf16):
    """Same bf16-operand / f32-accumulate recipe as the kernel (tight check)."""
    out = code.astype(jnp.bfloat16)
    n = len(params)
    for i, (w, b) in enumerate(params):
        acc = jnp.dot(out, w.astype(jnp.bfloat16),
                      preferred_element_type=jnp.float32) + b
        if i < n - 1:
            if elementwise_bf16:
                a = acc.astype(jnp.bfloat16)
                out = jnp.where(a > 0, a, a * jnp.bfloat16(NEG_SLOPE))
            else:
                acc = jnp.where(acc > 0, acc, NEG_SLOPE * acc)
                out = acc.astype(jnp.bfloat16)
        else:
            out = acc
    return out


if __name__ == "__main__":
    key = jax.random.PRNGKey(0)
    key, kx = jax.random.split(key)
    params = init_params(key)
    elementwise_bf16, _ = _device_flags()

    # B=16: no padding; B=13: exercises batch padding + output slice/transpose.
    for B in (16, 13):
        code = jax.random.normal(jax.random.fold_in(kx, B), (B, DIMS[0]), jnp.float32)
        out = jax.block_until_ready(linear_decoder(code, params))
        assert out.shape == (B, DIMS[-1])

        ref_lo = reference_lowprec(code, params, elementwise_bf16)  # matched recipe
        ref_hi = reference_f32(code, params)                        # full precision
        assert jnp.allclose(out, ref_lo, atol=1e-3, rtol=1e-2), \
            "mismatch vs low-precision reference"
        assert jnp.allclose(out, ref_hi, atol=5e-2, rtol=5e-2), \
            "mismatch vs f32 reference"

    print("KERNEL_OK")
</pallas_src>

<mosaic_0001>
module attributes {stable_mosaic.version = 11 : i64} {
  func.func @linear_decoder_kernel(%arg0: i32, %arg1: memref<16x32xf32, #tpu.memory_space<vmem>>, %arg2: memref<32x64xbf16, #tpu.memory_space<vmem>>, %arg3: memref<1x64xf32, #tpu.memory_space<vmem>>, %arg4: memref<64x128xbf16, #tpu.memory_space<vmem>>, %arg5: memref<1x128xf32, #tpu.memory_space<vmem>>, %arg6: memref<128x256xbf16, #tpu.memory_space<vmem>>, %arg7: memref<1x256xf32, #tpu.memory_space<vmem>>, %arg8: memref<256x512xbf16, #tpu.memory_space<vmem>>, %arg9: memref<1x512xf32, #tpu.memory_space<vmem>>, %arg10: memref<512x256xbf16, #tpu.memory_space<vmem>>, %arg11: memref<1x256xf32, #tpu.memory_space<vmem>>, %arg12: memref<256x128xbf16, #tpu.memory_space<vmem>>, %arg13: memref<1x128xf32, #tpu.memory_space<vmem>>, %arg14: memref<16x128xbf16, #tpu.memory_space<vmem>>, %arg15: memref<16x1xf32, #tpu.memory_space<vmem>>, %arg16: memref<16x16xf32, #tpu.memory_space<vmem>>) attributes {dimension_semantics = [#tpu.dimension_semantics<parallel>], iteration_bounds = array<i64: 1>, scalar_prefetch = 0 : i64, scratch_operands = 0 : i64, tpu.core_type = #tpu.core_type<tc>, window_params = [{transform_indices = @transform_0, window_bounds = array<i64: 16, 32>}, {pipeline_mode = #tpu.pipeline_mode<synchronous>, transform_indices = @transform_1, window_bounds = array<i64: 32, 64>}, {pipeline_mode = #tpu.pipeline_mode<synchronous>, transform_indices = @transform_2, window_bounds = array<i64: 1, 64>}, {pipeline_mode = #tpu.pipeline_mode<synchronous>, transform_indices = @transform_3, window_bounds = array<i64: 64, 128>}, {pipeline_mode = #tpu.pipeline_mode<synchronous>, transform_indices = @transform_4, window_bounds = array<i64: 1, 128>}, {pipeline_mode = #tpu.pipeline_mode<synchronous>, transform_indices = @transform_5, window_bounds = array<i64: 128, 256>}, {pipeline_mode = #tpu.pipeline_mode<synchronous>, transform_indices = @transform_6, window_bounds = array<i64: 1, 256>}, {pipeline_mode = #tpu.pipeline_mode<synchronous>, transform_indices = @transform_7, window_bounds = array<i64: 256, 512>}, {pipeline_mode = #tpu.pipeline_mode<synchronous>, transform_indices = @transform_8, window_bounds = array<i64: 1, 512>}, {pipeline_mode = #tpu.pipeline_mode<synchronous>, transform_indices = @transform_9, window_bounds = array<i64: 512, 256>}, {pipeline_mode = #tpu.pipeline_mode<synchronous>, transform_indices = @transform_10, window_bounds = array<i64: 1, 256>}, {pipeline_mode = #tpu.pipeline_mode<synchronous>, transform_indices = @transform_11, window_bounds = array<i64: 256, 128>}, {pipeline_mode = #tpu.pipeline_mode<synchronous>, transform_indices = @transform_12, window_bounds = array<i64: 1, 128>}, {pipeline_mode = #tpu.pipeline_mode<synchronous>, transform_indices = @transform_13, window_bounds = array<i64: 16, 128>}, {pipeline_mode = #tpu.pipeline_mode<synchronous>, transform_indices = @transform_14, window_bounds = array<i64: 16, 1>}, {transform_indices = @transform_15, window_bounds = array<i64: 16, 16>}]} {
    %c0 = arith.constant 0 : index
    %c0_0 = arith.constant 0 : index
    %0 = vector.load %arg1[%c0, %c0_0] : memref<16x32xf32, #tpu.memory_space<vmem>>, vector<16x32xf32>
    %1 = arith.truncf %0 : vector<16x32xf32> to vector<16x32xbf16>
    %c0_1 = arith.constant 0 : index
    %c0_2 = arith.constant 0 : index
    %2 = vector.load %arg2[%c0_1, %c0_2] : memref<32x64xbf16, #tpu.memory_space<vmem>>, vector<32x64xbf16>
    %cst = arith.constant dense<0.000000e+00> : vector<16x64xf32>
    %3 = tpu.matmul %1, %2, %cst {dimension_numbers = #tpu.dot_dimension_numbers<[1], [0], [0], [1], [0, 0, 1, 1], [], []>} : vector<16x32xbf16>, vector<32x64xbf16>, vector<16x64xf32> -> vector<16x64xf32>
    %c0_3 = arith.constant 0 : index
    %c0_4 = arith.constant 0 : index
    %4 = vector.load %arg3[%c0_3, %c0_4] : memref<1x64xf32, #tpu.memory_space<vmem>>, vector<1x64xf32>
    %5 = vector.broadcast %4 : vector<1x64xf32> to vector<16x64xf32>
    %6 = arith.addf %3, %5 : vector<16x64xf32>
    %7 = arith.truncf %6 : vector<16x64xf32> to vector<16x64xbf16>
    %cst_5 = arith.constant 0.000000e+00 : bf16
    %8 = vector.broadcast %cst_5 : bf16 to vector<16x64xbf16>
    %9 = arith.cmpf ogt, %7, %8 : vector<16x64xbf16>
    %cst_6 = arith.constant 1.000980e-02 : bf16
    %10 = vector.broadcast %cst_6 : bf16 to vector<16x64xbf16>
    %11 = arith.mulf %7, %10 : vector<16x64xbf16>
    %12 = arith.select %9, %7, %11 : vector<16x64xi1>, vector<16x64xbf16>
    %c0_7 = arith.constant 0 : index
    %c0_8 = arith.constant 0 : index
    %13 = vector.load %arg4[%c0_7, %c0_8] : memref<64x128xbf16, #tpu.memory_space<vmem>>, vector<64x128xbf16>
    %cst_9 = arith.constant dense<0.000000e+00> : vector<16x128xf32>
    %14 = tpu.matmul %12, %13, %cst_9 {dimension_numbers = #tpu.dot_dimension_numbers<[1], [0], [0], [1], [0, 0, 1, 1], [], []>} : vector<16x64xbf16>, vector<64x128xbf16>, vector<16x128xf32> -> vector<16x128xf32>
    %c0_10 = arith.constant 0 : index
    %c0_11 = arith.constant 0 : index
    %15 = vector.load %arg5[%c0_10, %c0_11] : memref<1x128xf32, #tpu.memory_space<vmem>>, vector<1x128xf32>
    %16 = vector.broadcast %15 : vector<1x128xf32> to vector<16x128xf32>
    %17 = arith.addf %14, %16 : vector<16x128xf32>
    %18 = arith.truncf %17 : vector<16x128xf32> to vector<16x128xbf16>
    %cst_12 = arith.constant 0.000000e+00 : bf16
    %19 = vector.broadcast %cst_12 : bf16 to vector<16x128xbf16>
    %20 = arith.cmpf ogt, %18, %19 : vector<16x128xbf16>
    %cst_13 = arith.constant 1.000980e-02 : bf16
    %21 = vector.broadcast %cst_13 : bf16 to vector<16x128xbf16>
    %22 = arith.mulf %18, %21 : vector<16x128xbf16>
    %23 = arith.select %20, %18, %22 : vector<16x128xi1>, vector<16x128xbf16>
    %c0_14 = arith.constant 0 : index
    %c0_15 = arith.constant 0 : index
    %24 = vector.load %arg6[%c0_14, %c0_15] : memref<128x256xbf16, #tpu.memory_space<vmem>>, vector<128x256xbf16>
    %cst_16 = arith.constant dense<0.000000e+00> : vector<16x256xf32>
    %25 = tpu.matmul %23, %24, %cst_16 {dimension_numbers = #tpu.dot_dimension_numbers<[1], [0], [0], [1], [0, 0, 1, 1], [], []>} : vector<16x128xbf16>, vector<128x256xbf16>, vector<16x256xf32> -> vector<16x256xf32>
    %c0_17 = arith.constant 0 : index
    %c0_18 = arith.constant 0 : index
    %26 = vector.load %arg7[%c0_17, %c0_18] : memref<1x256xf32, #tpu.memory_space<vmem>>, vector<1x256xf32>
    %27 = vector.broadcast %26 : vector<1x256xf32> to vector<16x256xf32>
    %28 = arith.addf %25, %27 : vector<16x256xf32>
    %29 = arith.truncf %28 : vector<16x256xf32> to vector<16x256xbf16>
    %cst_19 = arith.constant 0.000000e+00 : bf16
    %30 = vector.broadcast %cst_19 : bf16 to vector<16x256xbf16>
    %31 = arith.cmpf ogt, %29, %30 : vector<16x256xbf16>
    %cst_20 = arith.constant 1.000980e-02 : bf16
    %32 = vector.broadcast %cst_20 : bf16 to vector<16x256xbf16>
    %33 = arith.mulf %29, %32 : vector<16x256xbf16>
    %34 = arith.select %31, %29, %33 : vector<16x256xi1>, vector<16x256xbf16>
    %c0_21 = arith.constant 0 : index
    %c0_22 = arith.constant 0 : index
    %35 = vector.load %arg8[%c0_21, %c0_22] : memref<256x512xbf16, #tpu.memory_space<vmem>>, vector<256x512xbf16>
    %cst_23 = arith.constant dense<0.000000e+00> : vector<16x512xf32>
    %36 = tpu.matmul %34, %35, %cst_23 {dimension_numbers = #tpu.dot_dimension_numbers<[1], [0], [0], [1], [0, 0, 1, 1], [], []>} : vector<16x256xbf16>, vector<256x512xbf16>, vector<16x512xf32> -> vector<16x512xf32>
    %c0_24 = arith.constant 0 : index
    %c0_25 = arith.constant 0 : index
    %37 = vector.load %arg9[%c0_24, %c0_25] : memref<1x512xf32, #tpu.memory_space<vmem>>, vector<1x512xf32>
    %38 = vector.broadcast %37 : vector<1x512xf32> to vector<16x512xf32>
    %39 = arith.addf %36, %38 : vector<16x512xf32>
    %40 = arith.truncf %39 : vector<16x512xf32> to vector<16x512xbf16>
    %cst_26 = arith.constant 0.000000e+00 : bf16
    %41 = vector.broadcast %cst_26 : bf16 to vector<16x512xbf16>
    %42 = arith.cmpf ogt, %40, %41 : vector<16x512xbf16>
    %cst_27 = arith.constant 1.000980e-02 : bf16
    %43 = vector.broadcast %cst_27 : bf16 to vector<16x512xbf16>
    %44 = arith.mulf %40, %43 : vector<16x512xbf16>
    %45 = arith.select %42, %40, %44 : vector<16x512xi1>, vector<16x512xbf16>
    %c0_28 = arith.constant 0 : index
    %c0_29 = arith.constant 0 : index
    %46 = vector.load %arg10[%c0_28, %c0_29] : memref<512x256xbf16, #tpu.memory_space<vmem>>, vector<512x256xbf16>
    %cst_30 = arith.constant dense<0.000000e+00> : vector<16x256xf32>
    %47 = tpu.matmul %45, %46, %cst_30 {dimension_numbers = #tpu.dot_dimension_numbers<[1], [0], [0], [1], [0, 0, 1, 1], [], []>} : vector<16x512xbf16>, vector<512x256xbf16>, vector<16x256xf32> -> vector<16x256xf32>
    %c0_31 = arith.constant 0 : index
    %c0_32 = arith.constant 0 : index
    %48 = vector.load %arg11[%c0_31, %c0_32] : memref<1x256xf32, #tpu.memory_space<vmem>>, vector<1x256xf32>
    %49 = vector.broadcast %48 : vector<1x256xf32> to vector<16x256xf32>
    %50 = arith.addf %47, %49 : vector<16x256xf32>
    %51 = arith.truncf %50 : vector<16x256xf32> to vector<16x256xbf16>
    %cst_33 = arith.constant 0.000000e+00 : bf16
    %52 = vector.broadcast %cst_33 : bf16 to vector<16x256xbf16>
    %53 = arith.cmpf ogt, %51, %52 : vector<16x256xbf16>
    %cst_34 = arith.constant 1.000980e-02 : bf16
    %54 = vector.broadcast %cst_34 : bf16 to vector<16x256xbf16>
    %55 = arith.mulf %51, %54 : vector<16x256xbf16>
    %56 = arith.select %53, %51, %55 : vector<16x256xi1>, vector<16x256xbf16>
    %c0_35 = arith.constant 0 : index
    %c0_36 = arith.constant 0 : index
    %57 = vector.load %arg12[%c0_35, %c0_36] : memref<256x128xbf16, #tpu.memory_space<vmem>>, vector<256x128xbf16>
    %cst_37 = arith.constant dense<0.000000e+00> : vector<16x128xf32>
    %58 = tpu.matmul %56, %57, %cst_37 {dimension_numbers = #tpu.dot_dimension_numbers<[1], [0], [0], [1], [0, 0, 1, 1], [], []>} : vector<16x256xbf16>, vector<256x128xbf16>, vector<16x128xf32> -> vector<16x128xf32>
    %c0_38 = arith.constant 0 : index
    %c0_39 = arith.constant 0 : index
    %59 = vector.load %arg13[%c0_38, %c0_39] : memref<1x128xf32, #tpu.memory_space<vmem>>, vector<1x128xf32>
    %60 = vector.broadcast %59 : vector<1x128xf32> to vector<16x128xf32>
    %61 = arith.addf %58, %60 : vector<16x128xf32>
    %62 = arith.truncf %61 : vector<16x128xf32> to vector<16x128xbf16>
    %cst_40 = arith.constant 0.000000e+00 : bf16
    %63 = vector.broadcast %cst_40 : bf16 to vector<16x128xbf16>
    %64 = arith.cmpf ogt, %62, %63 : vector<16x128xbf16>
    %cst_41 = arith.constant 1.000980e-02 : bf16
    %65 = vector.broadcast %cst_41 : bf16 to vector<16x128xbf16>
    %66 = arith.mulf %62, %65 : vector<16x128xbf16>
    %67 = arith.select %64, %62, %66 : vector<16x128xi1>, vector<16x128xbf16>
    %c0_42 = arith.constant 0 : index
    %c0_43 = arith.constant 0 : index
    %68 = vector.load %arg14[%c0_42, %c0_43] : memref<16x128xbf16, #tpu.memory_space<vmem>>, vector<16x128xbf16>
    %cst_44 = arith.constant dense<0.000000e+00> : vector<16x16xf32>
    %69 = tpu.matmul %68, %67, %cst_44 {dimension_numbers = #tpu.dot_dimension_numbers<[1], [1], [0], [0], [0, 0, 1, 0], [], []>} : vector<16x128xbf16>, vector<16x128xbf16>, vector<16x16xf32> -> vector<16x16xf32>
    %c0_45 = arith.constant 0 : index
    %c0_46 = arith.constant 0 : index
    %70 = vector.load %arg15[%c0_45, %c0_46] : memref<16x1xf32, #tpu.memory_space<vmem>>, vector<16x1xf32>
    %71 = vector.broadcast %70 : vector<16x1xf32> to vector<16x16xf32>
    %72 = arith.addf %69, %71 : vector<16x16xf32>
    %c0_47 = arith.constant 0 : index
    %c0_48 = arith.constant 0 : index
    %73 = vector.load %arg16[%c0_47, %c0_48] : memref<16x16xf32, #tpu.memory_space<vmem>>, vector<16x16xf32>
    tpu.vector_store %arg16[%c0_47, %c0_48], %72 {strides = array<i32>} : memref<16x16xf32, #tpu.memory_space<vmem>>, vector<16x16xf32>,
    return
  }
  func.func @transform_0(%arg0: i32) -> (i32, i32) {
    %c0_i32 = arith.constant 0 : i32
    %c0_i32_0 = arith.constant 0 : i32
    return %arg0, %c0_i32 : i32, i32
  }
  func.func @transform_1(%arg0: i32) -> (i32, i32) {
    %c0_i32 = arith.constant 0 : i32
    %c0_i32_0 = arith.constant 0 : i32
    %c0_i32_1 = arith.constant 0 : i32
    return %c0_i32, %c0_i32_0 : i32, i32
  }
  func.func @transform_2(%arg0: i32) -> (i32, i32) {
    %c0_i32 = arith.constant 0 : i32
    %c0_i32_0 = arith.constant 0 : i32
    %c0_i32_1 = arith.constant 0 : i32
    return %c0_i32, %c0_i32_0 : i32, i32
  }
  func.func @transform_3(%arg0: i32) -> (i32, i32) {
    %c0_i32 = arith.constant 0 : i32
    %c0_i32_0 = arith.constant 0 : i32
    %c0_i32_1 = arith.constant 0 : i32
    return %c0_i32, %c0_i32_0 : i32, i32
  }
  func.func @transform_4(%arg0: i32) -> (i32, i32) {
    %c0_i32 = arith.constant 0 : i32
    %c0_i32_0 = arith.constant 0 : i32
    %c0_i32_1 = arith.constant 0 : i32
    return %c0_i32, %c0_i32_0 : i32, i32
  }
  func.func @transform_5(%arg0: i32) -> (i32, i32) {
    %c0_i32 = arith.constant 0 : i32
    %c0_i32_0 = arith.constant 0 : i32
    %c0_i32_1 = arith.constant 0 : i32
    return %c0_i32, %c0_i32_0 : i32, i32
  }
  func.func @transform_6(%arg0: i32) -> (i32, i32) {
    %c0_i32 = arith.constant 0 : i32
    %c0_i32_0 = arith.constant 0 : i32
    %c0_i32_1 = arith.constant 0 : i32
    return %c0_i32, %c0_i32_0 : i32, i32
  }
  func.func @transform_7(%arg0: i32) -> (i32, i32) {
    %c0_i32 = arith.constant 0 : i32
    %c0_i32_0 = arith.constant 0 : i32
    %c0_i32_1 = arith.constant 0 : i32
    return %c0_i32, %c0_i32_0 : i32, i32
  }
  func.func @transform_8(%arg0: i32) -> (i32, i32) {
    %c0_i32 = arith.constant 0 : i32
    %c0_i32_0 = arith.constant 0 : i32
    %c0_i32_1 = arith.constant 0 : i32
    return %c0_i32, %c0_i32_0 : i32, i32
  }
  func.func @transform_9(%arg0: i32) -> (i32, i32) {
    %c0_i32 = arith.constant 0 : i32
    %c0_i32_0 = arith.constant 0 : i32
    %c0_i32_1 = arith.constant 0 : i32
    return %c0_i32, %c0_i32_0 : i32, i32
  }
  func.func @transform_10(%arg0: i32) -> (i32, i32) {
    %c0_i32 = arith.constant 0 : i32
    %c0_i32_0 = arith.constant 0 : i32
    %c0_i32_1 = arith.constant 0 : i32
    return %c0_i32, %c0_i32_0 : i32, i32
  }
  func.func @transform_11(%arg0: i32) -> (i32, i32) {
    %c0_i32 = arith.constant 0 : i32
    %c0_i32_0 = arith.constant 0 : i32
    %c0_i32_1 = arith.constant 0 : i32
    return %c0_i32, %c0_i32_0 : i32, i32
  }
  func.func @transform_12(%arg0: i32) -> (i32, i32) {
    %c0_i32 = arith.constant 0 : i32
    %c0_i32_0 = arith.constant 0 : i32
    %c0_i32_1 = arith.constant 0 : i32
    return %c0_i32, %c0_i32_0 : i32, i32
  }
  func.func @transform_13(%arg0: i32) -> (i32, i32) {
    %c0_i32 = arith.constant 0 : i32
    %c0_i32_0 = arith.constant 0 : i32
    %c0_i32_1 = arith.constant 0 : i32
    return %c0_i32, %c0_i32_0 : i32, i32
  }
  func.func @transform_14(%arg0: i32) -> (i32, i32) {
    %c0_i32 = arith.constant 0 : i32
    %c0_i32_0 = arith.constant 0 : i32
    %c0_i32_1 = arith.constant 0 : i32
    return %c0_i32, %c0_i32_0 : i32, i32
  }
  func.func @transform_15(%arg0: i32) -> (i32, i32) {
    %c0_i32 = arith.constant 0 : i32
    %c0_i32_0 = arith.constant 0 : i32
    return %c0_i32, %arg0 : i32, i32
  }
}

</mosaic_0001>

<llo_original>
// kernel: tpu_custom_call.1
$region0: #{tpu_custom_call.1}
  #allocation0 [shape = 'u32[]', space=smem, size = 0x4, offset = 0x4, fixed_abs, tag = 'smem constant byte address 0x4 - core index']
  #allocation1 [shape = 'u32[72,128]{1,0:T(1,128)}', space=vmem, size = 0x9000, scoped, tag = 'internal scratch']
  %s0 = inlined_call_operand.vmem [shape: f32[16,32], index: 0, kind: input, shape index: {}]
  %s1 = inlined_call_operand.hbm [shape: bf16[32,64], index: 1, kind: input, shape index: {}]
  %s2 = inlined_call_operand.hbm [shape: f32[1,64], index: 2, kind: input, shape index: {}]
  %s3 = inlined_call_operand.hbm [shape: bf16[64,128], index: 3, kind: input, shape index: {}]
  %s4 = inlined_call_operand.hbm [shape: f32[1,128], index: 4, kind: input, shape index: {}]
  %s5 = inlined_call_operand.hbm [shape: bf16[128,256], index: 5, kind: input, shape index: {}]
  %s6 = inlined_call_operand.hbm [shape: f32[1,256], index: 6, kind: input, shape index: {}]
  %s7 = inlined_call_operand.hbm [shape: bf16[256,512], index: 7, kind: input, shape index: {}]
  %s8 = inlined_call_operand.hbm [shape: f32[1,512], index: 8, kind: input, shape index: {}]
  %s9 = inlined_call_operand.hbm [shape: bf16[512,256], index: 9, kind: input, shape index: {}]
  %s10 = inlined_call_operand.vmem [shape: f32[1,256], index: 10, kind: input, shape index: {}]
  %s11 = inlined_call_operand.hbm [shape: bf16[256,128], index: 11, kind: input, shape index: {}]
  %s12 = inlined_call_operand.vmem [shape: f32[1,128], index: 12, kind: input, shape index: {}]
  %s13 = inlined_call_operand.vmem [shape: bf16[16,128], index: 13, kind: input, shape index: {}]
  %s14 = inlined_call_operand.vmem [shape: f32[16,1], index: 14, kind: input, shape index: {}]
  %s15 = inlined_call_operand.hbm [shape: f32[16,16], index: 15, kind: output, shape index: {}]
  %s16 = sld [smem:[#allocation0]]
  $region110: #{tpu_custom_call.1} parent=0
    _
  %s18 = ssub.s32 1, %s16
  %s19 = scalar_select 0, %s18, %s16
  $region1: #{tpu_custom_call.1} parent=0
    #allocation2 [shape = 'u8[8192]{0}', space=vmem, size = 0x2000, scoped, tag = 'input window, operand 1, single buffered']
    #allocation3 [shape = 's32[1]{0}', space=sflag, size = 0x4, scoped, tag = 'scoped memory for tpu_custom_call.1']
    #allocation4 [shape = 's32[1]{0}', space=sflag, size = 0x4, scoped, tag = 'scoped memory for tpu_custom_call.1']
    #allocation5 [shape = 'u8[512]{0}', space=vmem, size = 0x400, scoped, tag = 'input window, operand 2, single buffered']
    #allocation6 [shape = 's32[1]{0}', space=sflag, size = 0x4, scoped, tag = 'scoped memory for tpu_custom_call.1']
    #allocation7 [shape = 'u8[16384]{0}', space=vmem, size = 0x4000, scoped, tag = 'input window, operand 3, single buffered']
    #allocation8 [shape = 'u8[512]{0}', space=vmem, size = 0x400, scoped, tag = 'input window, operand 4, single buffered']
    #allocation9 [shape = 's32[1]{0}', space=sflag, size = 0x4, scoped, tag = 'scoped memory for tpu_custom_call.1']
    #allocation10 [shape = 'u8[65536]{0}', space=vmem, size = 0x10000, scoped, tag = 'input window, operand 5, single buffered']
    #allocation11 [shape = 'u8[1024]{0}', space=vmem, size = 0x400, scoped, tag = 'input window, operand 6, single buffered']
    #allocation12 [shape = 's32[1]{0}', space=sflag, size = 0x4, scoped, tag = 'scoped memory for tpu_custom_call.1']
    #allocation13 [shape = 'u8[262144]{0}', space=vmem, size = 0x40000, scoped, tag = 'input window, operand 7, single buffered']
    #allocation14 [shape = 'u8[2048]{0}', space=vmem, size = 0x800, scoped, tag = 'input window, operand 8, single buffered']
    #allocation15 [shape = 's32[1]{0}', space=sflag, size = 0x4, scoped, tag = 'scoped memory for tpu_custom_call.1']
    #allocation16 [shape = 'u8[262144]{0}', space=vmem, size = 0x40000, scoped, tag = 'input window, operand 9, single buffered']
    #allocation17 [shape = 'u8[65536]{0}', space=vmem, size = 0x10000, scoped, tag = 'input window, operand 11, single buffered']
    #allocation18 [shape = 's32[1]{0}', space=sflag, size = 0x4, scoped, tag = 'scoped memory for tpu_custom_call.1']
    #allocation19 [shape = 'u8[8192]{0}', space=vmem, size = 0x2000, scoped, tag = 'output window, operand 0, single buffered']
    %20 = vsyncpa [#allocation3], 0
    %21 = vsyncpa [#allocation6], 0
    %22 = vsyncpa [#allocation9], 0
    %23 = vsyncpa [#allocation12], 0
    %24 = vsyncpa [#allocation15], 0
    %25 = vsyncpa [#allocation18], 0
    %26 = vsyncpa [#allocation4], 0
    // Predicated region
    $region2: #{tpu_custom_call.1} parent=1 // pred_check
      _
    $region3: #{tpu_custom_call.1} parent=1 // pred_check_branch
      %28 = sbr.rel (0) target = $region5
    $region4: #{tpu_custom_call.1} parent=1 // pred_region
      _
    $region5: #{tpu_custom_call.1} parent=1 // pred_fallthru
      _
    // Predicated region
    $region6: #{tpu_custom_call.1} parent=1 // pred_check
      _
    $region7: #{tpu_custom_call.1} parent=1 // pred_check_branch
      %30 = sbr.rel (0) target = $region9
    $region8: #{tpu_custom_call.1} parent=1 // pred_region
      %32 = vsyncadd [#allocation3], 0
      %s33 = sshll.u32 %s1, 4
      %s34 = int_to_ptr.hbm [resolvable:$true] %s33
      %s35 = sshll.u32 [#allocation2], 4
      %s36 = int_to_ptr.vmem [resolvable:$true] %s35
      %41 = dma.hbm_to_vmem [thread:$0]  %s34, 256, %s36, [#allocation3], 64, 64, 4
    $region9: #{tpu_custom_call.1} parent=1 // pred_fallthru
      _
    // Predicated region
    $region10: #{tpu_custom_call.1} parent=1 // pred_check
      _
    $region11: #{tpu_custom_call.1} parent=1 // pred_check_branch
      %43 = sbr.rel (0) target = $region13
    $region12: #{tpu_custom_call.1} parent=1 // pred_region
      %45 = vsyncadd [#allocation6], 0
      %s47 = sshll.u32 %s2, 4
      %s48 = int_to_ptr.hbm [resolvable:$true] %s47
      %s49 = sshll.u32 [#allocation5], 4
      %s50 = int_to_ptr.vmem [resolvable:$true] %s49
      %52 = dma.hbm_to_vmem [thread:$0]  %s48, 16, %s50, [#allocation6]
    $region13: #{tpu_custom_call.1} parent=1 // pred_fallthru
      _
    // Predicated region
    $region14: #{tpu_custom_call.1} parent=1 // pred_check
      _
    $region15: #{tpu_custom_call.1} parent=1 // pred_check_branch
      %54 = sbr.rel (0) target = $region17
    $region16: #{tpu_custom_call.1} parent=1 // pred_region
      %56 = vsyncadd [#allocation6], 0
      %s57 = sshll.u32 %s3, 4
      %s58 = int_to_ptr.hbm [resolvable:$true] %s57
      %s59 = sshll.u32 [#allocation7], 4
      %s60 = int_to_ptr.vmem [resolvable:$true] %s59
      %65 = dma.hbm_to_vmem [thread:$0]  %s58, 512, %s60, [#allocation6], 64, 64, 4
    $region17: #{tpu_custom_call.1} parent=1 // pred_fallthru
      _
    // Predicated region
    $region18: #{tpu_custom_call.1} parent=1 // pred_check
      _
    $region19: #{tpu_custom_call.1} parent=1 // pred_check_branch
      %67 = sbr.rel (0) target = $region21
    $region20: #{tpu_custom_call.1} parent=1 // pred_region
      %69 = vsyncadd [#allocation9], 0
      %s71 = sshll.u32 %s4, 4
      %s72 = int_to_ptr.hbm [resolvable:$true] %s71
      %s73 = sshll.u32 [#allocation8], 4
      %s74 = int_to_ptr.vmem [resolvable:$true] %s73
      %76 = dma.hbm_to_vmem [thread:$0]  %s72, 16, %s74, [#allocation9]
    $region21: #{tpu_custom_call.1} parent=1 // pred_fallthru
      _
    // Predicated region
    $region22: #{tpu_custom_call.1} parent=1 // pred_check
      _
    $region23: #{tpu_custom_call.1} parent=1 // pred_check_branch
      %78 = sbr.rel (0) target = $region25
    $region24: #{tpu_custom_call.1} parent=1 // pred_region
      %80 = vsyncadd [#allocation9], 0
      %s81 = sshll.u32 %s5, 4
      %s82 = int_to_ptr.hbm [resolvable:$true] %s81
      %s83 = sshll.u32 [#allocation10], 4
      %s84 = int_to_ptr.vmem [resolvable:$true] %s83
      %89 = dma.hbm_to_vmem [thread:$0]  %s82, 2048, %s84, [#allocation9], 128, 128, 8
    $region25: #{tpu_custom_call.1} parent=1 // pred_fallthru
      _
    // Predicated region
    $region26: #{tpu_custom_call.1} parent=1 // pred_check
      _
    $region27: #{tpu_custom_call.1} parent=1 // pred_check_branch
      %91 = sbr.rel (0) target = $region29
    $region28: #{tpu_custom_call.1} parent=1 // pred_region
      %93 = vsyncadd [#allocation12], 0
      %s95 = sshll.u32 %s6, 4
      %s96 = int_to_ptr.hbm [resolvable:$true] %s95
      %s97 = sshll.u32 [#allocation11], 4
      %s98 = int_to_ptr.vmem [resolvable:$true] %s97
      %100 = dma.hbm_to_vmem [thread:$0]  %s96, 32, %s98, [#allocation12]
    $region29: #{tpu_custom_call.1} parent=1 // pred_fallthru
      _
    // Predicated region
    $region30: #{tpu_custom_call.1} parent=1 // pred_check
      _
    $region31: #{tpu_custom_call.1} parent=1 // pred_check_branch
      %102 = sbr.rel (0) target = $region33
    $region32: #{tpu_custom_call.1} parent=1 // pred_region
      %104 = vsyncadd [#allocation12], 0
      %s105 = sshll.u32 %s7, 4
      %s106 = int_to_ptr.hbm [resolvable:$true] %s105
      %s107 = sshll.u32 [#allocation13], 4
      %s108 = int_to_ptr.vmem [resolvable:$true] %s107
      %113 = dma.hbm_to_vmem [thread:$0]  %s106, 8192, %s108, [#allocation12], 256, 256, 16
    $region33: #{tpu_custom_call.1} parent=1 // pred_fallthru
      _
    // Predicated region
    $region34: #{tpu_custom_call.1} parent=1 // pred_check
      _
    $region35: #{tpu_custom_call.1} parent=1 // pred_check_branch
      %115 = sbr.rel (0) target = $region37
    $region36: #{tpu_custom_call.1} parent=1 // pred_region
      %117 = vsyncadd [#allocation15], 0
      %s119 = sshll.u32 %s8, 4
      %s120 = int_to_ptr.hbm [resolvable:$true] %s119
      %s121 = sshll.u32 [#allocation14], 4
      %s122 = int_to_ptr.vmem [resolvable:$true] %s121
      %124 = dma.hbm_to_vmem [thread:$0]  %s120, 64, %s122, [#allocation15]
    $region37: #{tpu_custom_call.1} parent=1 // pred_fallthru
      _
    // Predicated region
    $region38: #{tpu_custom_call.1} parent=1 // pred_check
      _
    $region39: #{tpu_custom_call.1} parent=1 // pred_check_branch
      %126 = sbr.rel (0) target = $region41
    $region40: #{tpu_custom_call.1} parent=1 // pred_region
      %128 = vsyncadd [#allocation15], 0
      %s129 = sshll.u32 %s9, 4
      %s130 = int_to_ptr.hbm [resolvable:$true] %s129
      %s131 = sshll.u32 [#allocation16], 4
      %s132 = int_to_ptr.vmem [resolvable:$true] %s131
      %137 = dma.hbm_to_vmem [thread:$0]  %s130, 8192, %s132, [#allocation15], 128, 128, 8
    $region41: #{tpu_custom_call.1} parent=1 // pred_fallthru
      _
    // Predicated region
    $region42: #{tpu_custom_call.1} parent=1 // pred_check
      _
    $region43: #{tpu_custom_call.1} parent=1 // pred_check_branch
      %139 = sbr.rel (0) target = $region45
    $region44: #{tpu_custom_call.1} parent=1 // pred_region
      _
    $region45: #{tpu_custom_call.1} parent=1 // pred_fallthru
      _
    // Predicated region
    $region46: #{tpu_custom_call.1} parent=1 // pred_check
      _
    $region47: #{tpu_custom_call.1} parent=1 // pred_check_branch
      %141 = sbr.rel (0) target = $region49
    $region48: #{tpu_custom_call.1} parent=1 // pred_region
      %143 = vsyncadd [#allocation18], 0
      %s144 = sshll.u32 %s11, 4
      %s145 = int_to_ptr.hbm [resolvable:$true] %s144
      %s146 = sshll.u32 [#allocation17], 4
      %s147 = int_to_ptr.vmem [resolvable:$true] %s146
      %152 = dma.hbm_to_vmem [thread:$0]  %s145, 2048, %s147, [#allocation18], 64, 64, 4
    $region49: #{tpu_custom_call.1} parent=1 // pred_fallthru
      _
    // Predicated region
    $region50: #{tpu_custom_call.1} parent=1 // pred_check
      _
    $region51: #{tpu_custom_call.1} parent=1 // pred_check_branch
      %154 = sbr.rel (0) target = $region53
    $region52: #{tpu_custom_call.1} parent=1 // pred_region
      _
    $region53: #{tpu_custom_call.1} parent=1 // pred_fallthru
      _
    // Predicated region
    $region54: #{tpu_custom_call.1} parent=1 // pred_check
      _
    $region55: #{tpu_custom_call.1} parent=1 // pred_check_branch
      %156 = sbr.rel (0) target = $region57
    $region56: #{tpu_custom_call.1} parent=1 // pred_region
      _
    $region57: #{tpu_custom_call.1} parent=1 // pred_fallthru
      _
    // Predicated region
    $region58: #{tpu_custom_call.1} parent=1 // pred_check
      _
    $region59: #{tpu_custom_call.1} parent=1 // pred_check_branch
      %158 = sbr.rel (0) target = $region61
    $region60: #{tpu_custom_call.1} parent=1 // pred_region
      _
    $region61: #{tpu_custom_call.1} parent=1 // pred_fallthru
      _
    // Predicated region
    $region62: #{tpu_custom_call.1} parent=1 // pred_check
      _
    $region63: #{tpu_custom_call.1} parent=1 // pred_check_branch
      %160 = sbr.rel (0) target = $region65
    $region64: #{tpu_custom_call.1} parent=1 // pred_region
      %162 = dma.done [#allocation3], 256
    $region65: #{tpu_custom_call.1} parent=1 // pred_fallthru
      _
    // Predicated region
    $region66: #{tpu_custom_call.1} parent=1 // pred_check
      _
    $region67: #{tpu_custom_call.1} parent=1 // pred_check_branch
      %164 = sbr.rel (0) target = $region69
    $region68: #{tpu_custom_call.1} parent=1 // pred_region
      %166 = dma.done [#allocation6], 16
    $region69: #{tpu_custom_call.1} parent=1 // pred_fallthru
      _
    // Predicated region
    $region70: #{tpu_custom_call.1} parent=1 // pred_check
      _
    $region71: #{tpu_custom_call.1} parent=1 // pred_check_branch
      %168 = sbr.rel (0) target = $region73
    $region72: #{tpu_custom_call.1} parent=1 // pred_region
      %170 = dma.done [#allocation6], 512
    $region73: #{tpu_custom_call.1} parent=1 // pred_fallthru
      _
    // Predicated region
    $region74: #{tpu_custom_call.1} parent=1 // pred_check
      _
    $region75: #{tpu_custom_call.1} parent=1 // pred_check_branch
      %172 = sbr.rel (0) target = $region77
    $region76: #{tpu_custom_call.1} parent=1 // pred_region
      %174 = dma.done [#allocation9], 16
    $region77: #{tpu_custom_call.1} parent=1 // pred_fallthru
      _
    // Predicated region
    $region78: #{tpu_custom_call.1} parent=1 // pred_check
      _
    $region79: #{tpu_custom_call.1} parent=1 // pred_check_branch
      %176 = sbr.rel (0) target = $region81
    $region80: #{tpu_custom_call.1} parent=1 // pred_region
      %178 = dma.done [#allocation9], 2048
    $region81: #{tpu_custom_call.1} parent=1 // pred_fallthru
      _
    // Predicated region
    $region82: #{tpu_custom_call.1} parent=1 // pred_check
      _
    $region83: #{tpu_custom_call.1} parent=1 // pred_check_branch
      %180 = sbr.rel (0) target = $region85
    $region84: #{tpu_custom_call.1} parent=1 // pred_region
      %182 = dma.done [#allocation12], 32
    $region85: #{tpu_custom_call.1} parent=1 // pred_fallthru
      _
    // Predicated region
    $region86: #{tpu_custom_call.1} parent=1 // pred_check
      _
    $region87: #{tpu_custom_call.1} parent=1 // pred_check_branch
      %184 = sbr.rel (0) target = $region89
    $region88: #{tpu_custom_call.1} parent=1 // pred_region
      %186 = dma.done [#allocation12], 8192
    $region89: #{tpu_custom_call.1} parent=1 // pred_fallthru
      _
    // Predicated region
    $region90: #{tpu_custom_call.1} parent=1 // pred_check
      _
    $region91: #{tpu_custom_call.1} parent=1 // pred_check_branch
      %188 = sbr.rel (0) target = $region93
    $region92: #{tpu_custom_call.1} parent=1 // pred_region
      %190 = dma.done [#allocation15], 64
    $region93: #{tpu_custom_call.1} parent=1 // pred_fallthru
      _
    // Predicated region
    $region94: #{tpu_custom_call.1} parent=1 // pred_check
      _
    $region95: #{tpu_custom_call.1} parent=1 // pred_check_branch
      %192 = sbr.rel (0) target = $region97
    $region96: #{tpu_custom_call.1} parent=1 // pred_region
      %194 = dma.done [#allocation15], 8192
    $region97: #{tpu_custom_call.1} parent=1 // pred_fallthru
      _
    // Predicated region
    $region98: #{tpu_custom_call.1} parent=1 // pred_check
      _
    $region99: #{tpu_custom_call.1} parent=1 // pred_check_branch
      %196 = sbr.rel (0) target = $region101
    $region100: #{tpu_custom_call.1} parent=1 // pred_region
      %198 = dma.done [#allocation18], 2048
    $region101: #{tpu_custom_call.1} parent=1 // pred_fallthru
      _
    %v200 = vld [vmem:[%s0] sm:$0xff]
    %v201 = vld [vmem:[%s0 + $0x8] sm:$0xff]
    %v202 = vpack.c.bf16 %v201, %v200
    %v203 = vld [vmem:[#allocation2] sm:$0xf]
    %v204 = vld [vmem:[#allocation2 + $0x4] sm:$0xf]
    %v205 = vld [vmem:[#allocation2 + $0x8] sm:$0xf]
    %v206 = vld [vmem:[#allocation2 + $0xc] sm:$0xf]
    %v207 = vld [vmem:[#allocation5] sm:$0x1]
    %v209 = vperm.slane %v207, 0
    %v215 = vunpack.c.l.b16 %v203
    %v216 = vunpack.c.l.b16 %v204
    %v217 = vunpack.c.l.b16 %v205
    %v218 = vunpack.c.l.b16 %v206
    %v219 = vpack.c.b16 %v216, %v215
    %v220 = vpack.c.b16 %v218, %v217
    %vm223 = vcmask 261120
    %v225 = vsel %vm223, %v202, 0
    %227 = vmatpush.bf16.msra.mxu0 0
    %228 = vmatpush.bf16.msra.mxu0 0
    %229 = vmatpush.bf16.msra.mxu0 0
    %230 = vmatpush.bf16.msra.mxu0 0
    %231 = vmatpush.bf16.msra.mxu0 0
    %232 = vmatpush.bf16.msra.mxu0 0
    %233 = vmatpush.bf16.msra.mxu0 %v220
    %234 = vmatpush.bf16.msra.mxu0 %v219
    %235 = vmatmul.bf16.gmra.mxu0 %v225
    %v236 = vpop.f32.mrf.mxu0
    %v237 = vadd.f32 %v209, %v236
    %v238 = vpop.f32.mrf.mxu0
    %v239 = vadd.f32 %v209, %v238
    %240 = vdwg.mxu0
    %v241 = vpack.c.bf16 %v237, %v237
    %v242 = vpack.c.bf16 %v239, %v239
    %v243 = vunpack.c.l.bf16 %v241
    %v244 = vunpack.c.l.bf16 %v242
    %vm245 = vcmp.gt.f32.partialorder %v243, 0.0
    %vm246 = vcmp.gt.f32.partialorder %v244, 0.0
    %v247 = vmul.f32 %v243, 0.010009766
    %v248 = vmul.f32 %v244, 0.010009766
    %v249 = vpack.c.bf16 %v247, %v247
    %v250 = vpack.c.bf16 %v248, %v248
    %vm251 = vmpackc.low %vm245, %vm245
    %vm252 = vmpackc.low %vm246, %vm246
    %v253 = vsel %vm251, %v241, %v249
    %v254 = vsel %vm252, %v242, %v250
    %v255 = vld [vmem:[#allocation7] sm:$0xf]
    %v256 = vld [vmem:[#allocation7 + $0x4] sm:$0xf]
    %v257 = vld [vmem:[#allocation7 + $0x8] sm:$0xf]
    %v258 = vld [vmem:[#allocation7 + $0xc] sm:$0xf]
    %v259 = vld [vmem:[#allocation7 + $0x10] sm:$0xf]
    %v260 = vld [vmem:[#allocation7 + $0x14] sm:$0xf]
    %v261 = vld [vmem:[#allocation7 + $0x18] sm:$0xf]
    %v262 = vld [vmem:[#allocation7 + $0x1c] sm:$0xf]
    %v263 = vld [vmem:[#allocation8] sm:$0x1]
    %v265 = vperm.slane %v263, 0
    %v269 = vunpack.c.l.b16 %v253
    %v270 = vunpack.c.l.b16 %v254
    %v271 = vpack.c.b16 %v270, %v269
    %v280 = vunpack.c.l.b16 %v255
    %v281 = vunpack.c.l.b16 %v256
    %v282 = vunpack.c.l.b16 %v257
    %v283 = vunpack.c.l.b16 %v258
    %v284 = vunpack.c.l.b16 %v259
    %v285 = vunpack.c.l.b16 %v260
    %v286 = vunpack.c.l.b16 %v261
    %v287 = vunpack.c.l.b16 %v262
    %v288 = vpack.c.b16 %v281, %v280
    %v289 = vpack.c.b16 %v283, %v282
    %v290 = vpack.c.b16 %v285, %v284
    %v291 = vpack.c.b16 %v287, %v286
    %vm296 = vcmask 523264
    %v298 = vsel %vm296, %v271, 0
    %300 = vmatpush.bf16.msra.mxu0 0
    %301 = vmatpush.bf16.msra.mxu0 0
    %302 = vmatpush.bf16.msra.mxu0 0
    %303 = vmatpush.bf16.msra.mxu0 0
    %304 = vmatpush.bf16.msra.mxu0 %v291
    %305 = vmatpush.bf16.msra.mxu0 %v290
    %306 = vmatpush.bf16.msra.mxu0 %v289
    %307 = vmatpush.bf16.msra.mxu0 %v288
    %308 = vmatmul.bf16.gmra.mxu0 %v298
    %v309 = vpop.f32.mrf.mxu0
    %v310 = vadd.f32 %v265, %v309
    %v311 = vpop.f32.mrf.mxu0
    %v312 = vadd.f32 %v265, %v311
    %313 = vdwg.mxu0
    %v314 = vpack.c.bf16 %v310, %v310
    %v315 = vpack.c.bf16 %v312, %v312
    %v316 = vunpack.c.l.bf16 %v314
    %v317 = vunpack.c.l.bf16 %v315
    %vm318 = vcmp.gt.f32.partialorder %v316, 0.0
    %vm319 = vcmp.gt.f32.partialorder %v317, 0.0
    %v320 = vmul.f32 %v316, 0.010009766
    %v321 = vmul.f32 %v317, 0.010009766
    %v322 = vpack.c.bf16 %v320, %v320
    %v323 = vpack.c.bf16 %v321, %v321
    %vm324 = vmpackc.low %vm318, %vm318
    %vm325 = vmpackc.low %vm319, %vm319
    %v326 = vsel %vm324, %v314, %v322
    %v327 = vsel %vm325, %v315, %v323
    %v328 = vld [vmem:[#allocation10] sm:$0xff]
    %v329 = vld [vmem:[#allocation10 + $0x8] sm:$0xff]
    %v330 = vld [vmem:[#allocation10 + $0x10] sm:$0xff]
    %v331 = vld [vmem:[#allocation10 + $0x18] sm:$0xff]
    %v332 = vld [vmem:[#allocation10 + $0x20] sm:$0xff]
    %v333 = vld [vmem:[#allocation10 + $0x28] sm:$0xff]
    %v334 = vld [vmem:[#allocation10 + $0x30] sm:$0xff]
    %v335 = vld [vmem:[#allocation10 + $0x38] sm:$0xff]
    %v336 = vld [vmem:[#allocation10 + $0x40] sm:$0xff]
    %v337 = vld [vmem:[#allocation10 + $0x48] sm:$0xff]
    %v338 = vld [vmem:[#allocation10 + $0x50] sm:$0xff]
    %v339 = vld [vmem:[#allocation10 + $0x58] sm:$0xff]
    %v340 = vld [vmem:[#allocation10 + $0x60] sm:$0xff]
    %v341 = vld [vmem:[#allocation10 + $0x68] sm:$0xff]
    %v342 = vld [vmem:[#allocation10 + $0x70] sm:$0xff]
    %v343 = vld [vmem:[#allocation10 + $0x78] sm:$0xff]
    %v344 = vld [vmem:[#allocation11] sm:$0x3]
    %v346 = vperm.slane %v344, 0
    %v347 = vperm.slane %v344, 1
    %v352 = vunpack.c.l.b16 %v326
    %v353 = vunpack.c.l.b16 %v327
    %v354 = vpack.c.b16 %v353, %v352
    %v372 = vunpack.c.l.b16 %v328
    %v373 = vunpack.c.h.b16 %v328
    %v374 = vunpack.c.l.b16 %v329
    %v375 = vunpack.c.h.b16 %v329
    %v376 = vunpack.c.l.b16 %v330
    %v377 = vunpack.c.h.b16 %v330
    %v378 = vunpack.c.l.b16 %v331
    %v379 = vunpack.c.h.b16 %v331
    %v380 = vunpack.c.l.b16 %v332
    %v381 = vunpack.c.h.b16 %v332
    %v382 = vunpack.c.l.b16 %v333
    %v383 = vunpack.c.h.b16 %v333
    %v384 = vunpack.c.l.b16 %v334
    %v385 = vunpack.c.h.b16 %v334
    %v386 = vunpack.c.l.b16 %v335
    %v387 = vunpack.c.h.b16 %v335
    %v388 = vunpack.c.l.b16 %v336
    %v389 = vunpack.c.h.b16 %v336
    %v390 = vunpack.c.l.b16 %v337
    %v391 = vunpack.c.h.b16 %v337
    %v392 = vunpack.c.l.b16 %v338
    %v393 = vunpack.c.h.b16 %v338
    %v394 = vunpack.c.l.b16 %v339
    %v395 = vunpack.c.h.b16 %v339
    %v396 = vunpack.c.l.b16 %v340
    %v397 = vunpack.c.h.b16 %v340
    %v398 = vunpack.c.l.b16 %v341
    %v399 = vunpack.c.h.b16 %v341
    %v400 = vunpack.c.l.b16 %v342
    %v401 = vunpack.c.h.b16 %v342
    %v402 = vunpack.c.l.b16 %v343
    %v403 = vunpack.c.h.b16 %v343
    %v404 = vpack.c.b16 %v374, %v372
    %v405 = vpack.c.b16 %v375, %v373
    %v406 = vpack.c.b16 %v378, %v376
    %v407 = vpack.c.b16 %v379, %v377
    %v408 = vpack.c.b16 %v382, %v380
    %v409 = vpack.c.b16 %v383, %v381
    %v410 = vpack.c.b16 %v386, %v384
    %v411 = vpack.c.b16 %v387, %v385
    %v412 = vpack.c.b16 %v390, %v388
    %v413 = vpack.c.b16 %v391, %v389
    %v414 = vpack.c.b16 %v394, %v392
    %v415 = vpack.c.b16 %v395, %v393
    %v416 = vpack.c.b16 %v398, %v396
    %v417 = vpack.c.b16 %v399, %v397
    %v418 = vpack.c.b16 %v402, %v400
    %v419 = vpack.c.b16 %v403, %v401
    %436 = vmatpush.bf16.msra.mxu0 %v418
    %437 = vmatpush.bf16.msra.mxu0 %v416
    %438 = vmatpush.bf16.msra.mxu0 %v414
    %439 = vmatpush.bf16.msra.mxu0 %v412
    %440 = vmatpush.bf16.msra.mxu0 %v410
    %441 = vmatpush.bf16.msra.mxu0 %v408
    %442 = vmatpush.bf16.msra.mxu0 %v406
    %443 = vmatpush.bf16.msra.mxu0 %v404
    %444 = vmatmul.bf16.gmra.mxu0 %v354
    %v445 = vpop.f32.mrf.mxu0
    %v446 = vadd.f32 %v346, %v445
    %v447 = vpop.f32.mrf.mxu0
    %v448 = vadd.f32 %v346, %v447
    %449 = vdwg.mxu0
    %450 = vmatpush.bf16.msra.mxu0 %v419
    %451 = vmatpush.bf16.msra.mxu0 %v417
    %452 = vmatpush.bf16.msra.mxu0 %v415
    %453 = vmatpush.bf16.msra.mxu0 %v413
    %454 = vmatpush.bf16.msra.mxu0 %v411
    %455 = vmatpush.bf16.msra.mxu0 %v409
    %456 = vmatpush.bf16.msra.mxu0 %v407
    %457 = vmatpush.bf16.msra.mxu0 %v405
    %458 = vmatmul.bf16.gmra.mxu0 %v354
    %v459 = vpop.f32.mrf.mxu0
    %v460 = vadd.f32 %v347, %v459
    %v461 = vpop.f32.mrf.mxu0
    %v462 = vadd.f32 %v347, %v461
    %463 = vdwg.mxu0
    %v464 = vpack.c.bf16 %v460, %v446
    %v465 = vpack.c.bf16 %v462, %v448
    %v466 = vunpack.c.l.bf16 %v464
    %v467 = vunpack.c.h.bf16 %v464
    %v468 = vunpack.c.l.bf16 %v465
    %v469 = vunpack.c.h.bf16 %v465
    %vm470 = vcmp.gt.f32.partialorder %v466, 0.0
    %vm471 = vcmp.gt.f32.partialorder %v467, 0.0
    %vm472 = vcmp.gt.f32.partialorder %v468, 0.0
    %vm473 = vcmp.gt.f32.partialorder %v469, 0.0
    %v474 = vmul.f32 %v466, 0.010009766
    %v475 = vmul.f32 %v467, 0.010009766
    %v476 = vmul.f32 %v468, 0.010009766
    %v477 = vmul.f32 %v469, 0.010009766
    %v478 = vpack.c.bf16 %v475, %v474
    %v479 = vpack.c.bf16 %v477, %v476
    %vm480 = vmpackc.low %vm471, %vm470
    %vm481 = vmpackc.low %vm473, %vm472
    %v482 = vsel %vm480, %v464, %v478
    %v483 = vsel %vm481, %v465, %v479
    %v484 = vld [vmem:[#allocation13] sm:$0xff]
    %v485 = vld [vmem:[#allocation13 + $0x8] sm:$0xff]
    %v486 = vld [vmem:[#allocation13 + $0x10] sm:$0xff]
    %v487 = vld [vmem:[#allocation13 + $0x18] sm:$0xff]
    %v488 = vld [vmem:[#allocation13 + $0x20] sm:$0xff]
    %v489 = vld [vmem:[#allocation13 + $0x28] sm:$0xff]
    %v490 = vld [vmem:[#allocation13 + $0x30] sm:$0xff]
    %v491 = vld [vmem:[#allocation13 + $0x38] sm:$0xff]
    %v492 = vld [vmem:[#allocation13 + $0x40] sm:$0xff]
    %v493 = vld [vmem:[#allocation13 + $0x48] sm:$0xff]
    %v494 = vld [vmem:[#allocation13 + $0x50] sm:$0xff]
    %v495 = vld [vmem:[#allocation13 + $0x58] sm:$0xff]
    %v496 = vld [vmem:[#allocation13 + $0x60] sm:$0xff]
    %v497 = vld [vmem:[#allocation13 + $0x68] sm:$0xff]
    %v498 = vld [vmem:[#allocation13 + $0x70] sm:$0xff]
    %v499 = vld [vmem:[#allocation13 + $0x78] sm:$0xff]
    %v500 = vld [vmem:[#allocation13 + $0x80] sm:$0xff]
    %v501 = vld [vmem:[#allocation13 + $0x88] sm:$0xff]
    %v502 = vld [vmem:[#allocation13 + $0x90] sm:$0xff]
    %v503 = vld [vmem:[#allocation13 + $0x98] sm:$0xff]
    %v504 = vld [vmem:[#allocation13 + $0xa0] sm:$0xff]
    %v505 = vld [vmem:[#allocation13 + $0xa8] sm:$0xff]
    %v506 = vld [vmem:[#allocation13 + $0xb0] sm:$0xff]
    %v507 = vld [vmem:[#allocation13 + $0xb8] sm:$0xff]
    %v508 = vld [vmem:[#allocation13 + $0xc0] sm:$0xff]
    %v509 = vld [vmem:[#allocation13 + $0xc8] sm:$0xff]
    %v510 = vld [vmem:[#allocation13 + $0xd0] sm:$0xff]
    %v511 = vld [vmem:[#allocation13 + $0xd8] sm:$0xff]
    %v512 = vld [vmem:[#allocation13 + $0xe0] sm:$0xff]
    %v513 = vld [vmem:[#allocation13 + $0xe8] sm:$0xff]
    %v514 = vld [vmem:[#allocation13 + $0xf0] sm:$0xff]
    %v515 = vld [vmem:[#allocation13 + $0xf8] sm:$0xff]
    %v516 = vld [vmem:[#allocation13 + $0x100] sm:$0xff]
    %v517 = vld [vmem:[#allocation13 + $0x108] sm:$0xff]
    %v518 = vld [vmem:[#allocation13 + $0x110] sm:$0xff]
    %v519 = vld [vmem:[#allocation13 + $0x118] sm:$0xff]
    %v520 = vld [vmem:[#allocation13 + $0x120] sm:$0xff]
    %v521 = vld [vmem:[#allocation13 + $0x128] sm:$0xff]
    %v522 = vld [vmem:[#allocation13 + $0x130] sm:$0xff]
    %v523 = vld [vmem:[#allocation13 + $0x138] sm:$0xff]
    %v524 = vld [vmem:[#allocation13 + $0x140] sm:$0xff]
    %v525 = vld [vmem:[#allocation13 + $0x148] sm:$0xff]
    %v526 = vld [vmem:[#allocation13 + $0x150] sm:$0xff]
    %v527 = vld [vmem:[#allocation13 + $0x158] sm:$0xff]
    %v528 = vld [vmem:[#allocation13 + $0x160] sm:$0xff]
    %v529 = vld [vmem:[#allocation13 + $0x168] sm:$0xff]
    %v530 = vld [vmem:[#allocation13 + $0x170] sm:$0xff]
    %v531 = vld [vmem:[#allocation13 + $0x178] sm:$0xff]
    %v532 = vld [vmem:[#allocation13 + $0x180] sm:$0xff]
    %v533 = vld [vmem:[#allocation13 + $0x188] sm:$0xff]
    %v534 = vld [vmem:[#allocation13 + $0x190] sm:$0xff]
    %v535 = vld [vmem:[#allocation13 + $0x198] sm:$0xff]
    %v536 = vld [vmem:[#allocation13 + $0x1a0] sm:$0xff]
    %v537 = vld [vmem:[#allocation13 + $0x1a8] sm:$0xff]
    %v538 = vld [vmem:[#allocation13 + $0x1b0] sm:$0xff]
    %v539 = vld [vmem:[#allocation13 + $0x1b8] sm:$0xff]
    %v540 = vld [vmem:[#allocation13 + $0x1c0] sm:$0xff]
    %v541 = vld [vmem:[#allocation13 + $0x1c8] sm:$0xff]
    %v542 = vld [vmem:[#allocation13 + $0x1d0] sm:$0xff]
    %v543 = vld [vmem:[#allocation13 + $0x1d8] sm:$0xff]
    %v544 = vld [vmem:[#allocation13 + $0x1e0] sm:$0xff]
    %v545 = vld [vmem:[#allocation13 + $0x1e8] sm:$0xff]
    %v546 = vld [vmem:[#allocation13 + $0x1f0] sm:$0xff]
    %v547 = vld [vmem:[#allocation13 + $0x1f8] sm:$0xff]
    %v548 = vld [vmem:[#allocation14] sm:$0xf]
    %v550 = vperm.slane %v548, 0
    %v551 = vperm.slane %v548, 1
    %v552 = vperm.slane %v548, 2
    %v553 = vperm.slane %v548, 3
    %v560 = vunpack.c.l.b16 %v482
    %v561 = vunpack.c.h.b16 %v482
    %v562 = vunpack.c.l.b16 %v483
    %v563 = vunpack.c.h.b16 %v483
    %v564 = vpack.c.b16 %v562, %v560
    %v565 = vpack.c.b16 %v563, %v561
    %v632 = vunpack.c.l.b16 %v484
    %v633 = vunpack.c.h.b16 %v484
    %v634 = vunpack.c.l.b16 %v485
    %v635 = vunpack.c.h.b16 %v485
    %v636 = vunpack.c.l.b16 %v486
    %v637 = vunpack.c.h.b16 %v486
    %v638 = vunpack.c.l.b16 %v487
    %v639 = vunpack.c.h.b16 %v487
    %v640 = vunpack.c.l.b16 %v488
    %v641 = vunpack.c.h.b16 %v488
    %v642 = vunpack.c.l.b16 %v489
    %v643 = vunpack.c.h.b16 %v489
    %v644 = vunpack.c.l.b16 %v490
    %v645 = vunpack.c.h.b16 %v490
    %v646 = vunpack.c.l.b16 %v491
    %v647 = vunpack.c.h.b16 %v491
    %v648 = vunpack.c.l.b16 %v492
    %v649 = vunpack.c.h.b16 %v492
    %v650 = vunpack.c.l.b16 %v493
    %v651 = vunpack.c.h.b16 %v493
    %v652 = vunpack.c.l.b16 %v494
    %v653 = vunpack.c.h.b16 %v494
    %v654 = vunpack.c.l.b16 %v495
    %v655 = vunpack.c.h.b16 %v495
    %v656 = vunpack.c.l.b16 %v496
    %v657 = vunpack.c.h.b16 %v496
    %v658 = vunpack.c.l.b16 %v497
    %v659 = vunpack.c.h.b16 %v497
    %v660 = vunpack.c.l.b16 %v498
    %v661 = vunpack.c.h.b16 %v498
    %v662 = vunpack.c.l.b16 %v499
    %v663 = vunpack.c.h.b16 %v499
    %v664 = vunpack.c.l.b16 %v500
    %v665 = vunpack.c.h.b16 %v500
    %v666 = vunpack.c.l.b16 %v501
    %v667 = vunpack.c.h.b16 %v501
    %v668 = vunpack.c.l.b16 %v502
    %v669 = vunpack.c.h.b16 %v502
    %v670 = vunpack.c.l.b16 %v503
    %v671 = vunpack.c.h.b16 %v503
    %v672 = vunpack.c.l.b16 %v504
    %v673 = vunpack.c.h.b16 %v504
    %v674 = vunpack.c.l.b16 %v505
    %v675 = vunpack.c.h.b16 %v505
    %v676 = vunpack.c.l.b16 %v506
    %v677 = vunpack.c.h.b16 %v506
    %v678 = vunpack.c.l.b16 %v507
    %v679 = vunpack.c.h.b16 %v507
    %v680 = vunpack.c.l.b16 %v508
    %v681 = vunpack.c.h.b16 %v508
    %v682 = vunpack.c.l.b16 %v509
    %v683 = vunpack.c.h.b16 %v509
    %v684 = vunpack.c.l.b16 %v510
    %v685 = vunpack.c.h.b16 %v510
    %v686 = vunpack.c.l.b16 %v511
    %v687 = vunpack.c.h.b16 %v511
    %v688 = vunpack.c.l.b16 %v512
    %v689 = vunpack.c.h.b16 %v512
    %v690 = vunpack.c.l.b16 %v513
    %v691 = vunpack.c.h.b16 %v513
    %v692 = vunpack.c.l.b16 %v514
    %v693 = vunpack.c.h.b16 %v514
    %v694 = vunpack.c.l.b16 %v515
    %v695 = vunpack.c.h.b16 %v515
    %v696 = vunpack.c.l.b16 %v516
    %v697 = vunpack.c.h.b16 %v516
    %v698 = vunpack.c.l.b16 %v517
    %v699 = vunpack.c.h.b16 %v517
    %v700 = vunpack.c.l.b16 %v518
    %v701 = vunpack.c.h.b16 %v518
    %v702 = vunpack.c.l.b16 %v519
    %v703 = vunpack.c.h.b16 %v519
    %v704 = vunpack.c.l.b16 %v520
    %v705 = vunpack.c.h.b16 %v520
    %v706 = vunpack.c.l.b16 %v521
    %v707 = vunpack.c.h.b16 %v521
    %v708 = vunpack.c.l.b16 %v522
    %v709 = vunpack.c.h.b16 %v522
    %v710 = vunpack.c.l.b16 %v523
    %v711 = vunpack.c.h.b16 %v523
    %v712 = vunpack.c.l.b16 %v524
    %v713 = vunpack.c.h.b16 %v524
    %v714 = vunpack.c.l.b16 %v525
    %v715 = vunpack.c.h.b16 %v525
    %v716 = vunpack.c.l.b16 %v526
    %v717 = vunpack.c.h.b16 %v526
    %v718 = vunpack.c.l.b16 %v527
    %v719 = vunpack.c.h.b16 %v527
    %v720 = vunpack.c.l.b16 %v528
    %v721 = vunpack.c.h.b16 %v528
    %v722 = vunpack.c.l.b16 %v529
    %v723 = vunpack.c.h.b16 %v529
    %v724 = vunpack.c.l.b16 %v530
    %v725 = vunpack.c.h.b16 %v530
    %v726 = vunpack.c.l.b16 %v531
    %v727 = vunpack.c.h.b16 %v531
    %v728 = vunpack.c.l.b16 %v532
    %v729 = vunpack.c.h.b16 %v532
    %v730 = vunpack.c.l.b16 %v533
    %v731 = vunpack.c.h.b16 %v533
    %v732 = vunpack.c.l.b16 %v534
    %v733 = vunpack.c.h.b16 %v534
    %v734 = vunpack.c.l.b16 %v535
    %v735 = vunpack.c.h.b16 %v535
    %v736 = vunpack.c.l.b16 %v536
    %v737 = vunpack.c.h.b16 %v536
    %v738 = vunpack.c.l.b16 %v537
    %v739 = vunpack.c.h.b16 %v537
    %v740 = vunpack.c.l.b16 %v538
    %v741 = vunpack.c.h.b16 %v538
    %v742 = vunpack.c.l.b16 %v539
    %v743 = vunpack.c.h.b16 %v539
    %v744 = vunpack.c.l.b16 %v540
    %v745 = vunpack.c.h.b16 %v540
    %v746 = vunpack.c.l.b16 %v541
    %v747 = vunpack.c.h.b16 %v541
    %v748 = vunpack.c.l.b16 %v542
    %v749 = vunpack.c.h.b16 %v542
    %v750 = vunpack.c.l.b16 %v543
    %v751 = vunpack.c.h.b16 %v543
    %v752 = vunpack.c.l.b16 %v544
    %v753 = vunpack.c.h.b16 %v544
    %v754 = vunpack.c.l.b16 %v545
    %v755 = vunpack.c.h.b16 %v545
    %v756 = vunpack.c.l.b16 %v546
    %v757 = vunpack.c.h.b16 %v546
    %v758 = vunpack.c.l.b16 %v547
    %v759 = vunpack.c.h.b16 %v547
    %v760 = vpack.c.b16 %v636, %v632
    %v761 = vpack.c.b16 %v637, %v633
    %v762 = vpack.c.b16 %v638, %v634
    %v763 = vpack.c.b16 %v639, %v635
    %v764 = vpack.c.b16 %v644, %v640
    %v765 = vpack.c.b16 %v645, %v641
    %v766 = vpack.c.b16 %v646, %v642
    %v767 = vpack.c.b16 %v647, %v643
    %v768 = vpack.c.b16 %v652, %v648
    %v769 = vpack.c.b16 %v653, %v649
    %v770 = vpack.c.b16 %v654, %v650
    %v771 = vpack.c.b16 %v655, %v651
    %v772 = vpack.c.b16 %v660, %v656
    %v773 = vpack.c.b16 %v661, %v657
    %v774 = vpack.c.b16 %v662, %v658
    %v775 = vpack.c.b16 %v663, %v659
    %v776 = vpack.c.b16 %v668, %v664
    %v777 = vpack.c.b16 %v669, %v665
    %v778 = vpack.c.b16 %v670, %v666
    %v779 = vpack.c.b16 %v671, %v667
    %v780 = vpack.c.b16 %v676, %v672
    %v781 = vpack.c.b16 %v677, %v673
    %v782 = vpack.c.b16 %v678, %v674
    %v783 = vpack.c.b16 %v679, %v675
    %v784 = vpack.c.b16 %v684, %v680
    %v785 = vpack.c.b16 %v685, %v681
    %v786 = vpack.c.b16 %v686, %v682
    %v787 = vpack.c.b16 %v687, %v683
    %v788 = vpack.c.b16 %v692, %v688
    %v789 = vpack.c.b16 %v693, %v689
    %v790 = vpack.c.b16 %v694, %v690
    %v791 = vpack.c.b16 %v695, %v691
    %v792 = vpack.c.b16 %v700, %v696
    %v793 = vpack.c.b16 %v701, %v697
    %v794 = vpack.c.b16 %v702, %v698
    %v795 = vpack.c.b16 %v703, %v699
    %v796 = vpack.c.b16 %v708, %v704
    %v797 = vpack.c.b16 %v709, %v705
    %v798 = vpack.c.b16 %v710, %v706
    %v799 = vpack.c.b16 %v711, %v707
    %v800 = vpack.c.b16 %v716, %v712
    %v801 = vpack.c.b16 %v717, %v713
    %v802 = vpack.c.b16 %v718, %v714
    %v803 = vpack.c.b16 %v719, %v715
    %v804 = vpack.c.b16 %v724, %v720
    %v805 = vpack.c.b16 %v725, %v721
    %v806 = vpack.c.b16 %v726, %v722
    %v807 = vpack.c.b16 %v727, %v723
    %v808 = vpack.c.b16 %v732, %v728
    %v809 = vpack.c.b16 %v733, %v729
    %v810 = vpack.c.b16 %v734, %v730
    %v811 = vpack.c.b16 %v735, %v731
    %v812 = vpack.c.b16 %v740, %v736
    %v813 = vpack.c.b16 %v741, %v737
    %v814 = vpack.c.b16 %v742, %v738
    %v815 = vpack.c.b16 %v743, %v739
    %v816 = vpack.c.b16 %v748, %v744
    %v817 = vpack.c.b16 %v749, %v745
    %v818 = vpack.c.b16 %v750, %v746
    %v819 = vpack.c.b16 %v751, %v747
    %v820 = vpack.c.b16 %v756, %v752
    %v821 = vpack.c.b16 %v757, %v753
    %v822 = vpack.c.b16 %v758, %v754
    %v823 = vpack.c.b16 %v759, %v755
    %888 = vmatpush.bf16.msra.mxu0 %v788
    %889 = vmatpush.bf16.msra.mxu0 %v784
    %890 = vmatpush.bf16.msra.mxu0 %v780
    %891 = vmatpush.bf16.msra.mxu0 %v776
    %892 = vmatpush.bf16.msra.mxu0 %v772
    %893 = vmatpush.bf16.msra.mxu0 %v768
    %894 = vmatpush.bf16.msra.mxu0 %v764
    %895 = vmatpush.bf16.msra.mxu0 %v760
    %896 = vmatmul.bf16.gmra.mxu0 %v564
    %v897 = vpop.f32.mrf.mxu0
    %v898 = vadd.f32 %v550, %v897
    %v899 = vpop.f32.mrf.mxu0
    %v900 = vadd.f32 %v550, %v899
    %901 = vdwg.mxu0
    %902 = vmatpush.bf16.msra.mxu0 %v820
    %903 = vmatpush.bf16.msra.mxu0 %v816
    %904 = vmatpush.bf16.msra.mxu0 %v812
    %905 = vmatpush.bf16.msra.mxu0 %v808
    %906 = vmatpush.bf16.msra.mxu0 %v804
    %907 = vmatpush.bf16.msra.mxu0 %v800
    %908 = vmatpush.bf16.msra.mxu0 %v796
    %909 = vmatpush.bf16.msra.mxu0 %v792
    %910 = vmatmul.bf16.gmra.mxu0 %v565
    %v911 = vpop.f32.mrf.mxu0
    %v912 = vadd.f32 %v898, %v911
    %v913 = vpop.f32.mrf.mxu0
    %v914 = vadd.f32 %v900, %v913
    %915 = vdwg.mxu0
    %916 = vmatpush.bf16.msra.mxu0 %v789
    %917 = vmatpush.bf16.msra.mxu0 %v785
    %918 = vmatpush.bf16.msra.mxu0 %v781
    %919 = vmatpush.bf16.msra.mxu0 %v777
    %920 = vmatpush.bf16.msra.mxu0 %v773
    %921 = vmatpush.bf16.msra.mxu0 %v769
    %922 = vmatpush.bf16.msra.mxu0 %v765
    %923 = vmatpush.bf16.msra.mxu0 %v761
    %924 = vmatmul.bf16.gmra.mxu0 %v564
    %v925 = vpop.f32.mrf.mxu0
    %v926 = vadd.f32 %v551, %v925
    %v927 = vpop.f32.mrf.mxu0
    %v928 = vadd.f32 %v551, %v927
    %929 = vdwg.mxu0
    %930 = vmatpush.bf16.msra.mxu0 %v821
    %931 = vmatpush.bf16.msra.mxu0 %v817
    %932 = vmatpush.bf16.msra.mxu0 %v813
    %933 = vmatpush.bf16.msra.mxu0 %v809
    %934 = vmatpush.bf16.msra.mxu0 %v805
    %935 = vmatpush.bf16.msra.mxu0 %v801
    %936 = vmatpush.bf16.msra.mxu0 %v797
    %937 = vmatpush.bf16.msra.mxu0 %v793
    %938 = vmatmul.bf16.gmra.mxu0 %v565
    %v939 = vpop.f32.mrf.mxu0
    %v940 = vadd.f32 %v926, %v939
    %v941 = vpop.f32.mrf.mxu0
    %v942 = vadd.f32 %v928, %v941
    %943 = vdwg.mxu0
    %944 = vmatpush.bf16.msra.mxu0 %v790
    %945 = vmatpush.bf16.msra.mxu0 %v786
    %946 = vmatpush.bf16.msra.mxu0 %v782
    %947 = vmatpush.bf16.msra.mxu0 %v778
    %948 = vmatpush.bf16.msra.mxu0 %v774
    %949 = vmatpush.bf16.msra.mxu0 %v770
    %950 = vmatpush.bf16.msra.mxu0 %v766
    %951 = vmatpush.bf16.msra.mxu0 %v762
    %952 = vmatmul.bf16.gmra.mxu0 %v564
    %v953 = vpop.f32.mrf.mxu0
    %v954 = vadd.f32 %v552, %v953
    %v955 = vpop.f32.mrf.mxu0
    %v956 = vadd.f32 %v552, %v955
    %957 = vdwg.mxu0
    %958 = vmatpush.bf16.msra.mxu0 %v822
    %959 = vmatpush.bf16.msra.mxu0 %v818
    %960 = vmatpush.bf16.msra.mxu0 %v814
    %961 = vmatpush.bf16.msra.mxu0 %v810
    %962 = vmatpush.bf16.msra.mxu0 %v806
    %963 = vmatpush.bf16.msra.mxu0 %v802
    %964 = vmatpush.bf16.msra.mxu0 %v798
    %965 = vmatpush.bf16.msra.mxu0 %v794
    %966 = vmatmul.bf16.gmra.mxu0 %v565
    %v967 = vpop.f32.mrf.mxu0
    %v968 = vadd.f32 %v954, %v967
    %v969 = vpop.f32.mrf.mxu0
    %v970 = vadd.f32 %v956, %v969
    %971 = vdwg.mxu0
    %972 = vmatpush.bf16.msra.mxu0 %v791
    %973 = vmatpush.bf16.msra.mxu0 %v787
    %974 = vmatpush.bf16.msra.mxu0 %v783
    %975 = vmatpush.bf16.msra.mxu0 %v779
    %976 = vmatpush.bf16.msra.mxu0 %v775
    %977 = vmatpush.bf16.msra.mxu0 %v771
    %978 = vmatpush.bf16.msra.mxu0 %v767
    %979 = vmatpush.bf16.msra.mxu0 %v763
    %980 = vmatmul.bf16.gmra.mxu0 %v564
    %v981 = vpop.f32.mrf.mxu0
    %v982 = vadd.f32 %v553, %v981
    %v983 = vpop.f32.mrf.mxu0
    %v984 = vadd.f32 %v553, %v983
    %985 = vdwg.mxu0
    %986 = vmatpush.bf16.msra.mxu0 %v823
    %987 = vmatpush.bf16.msra.mxu0 %v819
    %988 = vmatpush.bf16.msra.mxu0 %v815
    %989 = vmatpush.bf16.msra.mxu0 %v811
    %990 = vmatpush.bf16.msra.mxu0 %v807
    %991 = vmatpush.bf16.msra.mxu0 %v803
    %992 = vmatpush.bf16.msra.mxu0 %v799
    %993 = vmatpush.bf16.msra.mxu0 %v795
    %994 = vmatmul.bf16.gmra.mxu0 %v565
    %v995 = vpop.f32.mrf.mxu0
    %v996 = vadd.f32 %v982, %v995
    %v997 = vpop.f32.mrf.mxu0
    %v998 = vadd.f32 %v984, %v997
    %999 = vdwg.mxu0
    %v1000 = vpack.c.bf16 %v940, %v912
    %v1001 = vpack.c.bf16 %v996, %v968
    %v1002 = vpack.c.bf16 %v942, %v914
    %v1003 = vpack.c.bf16 %v998, %v970
    %v1004 = vunpack.c.l.bf16 %v1000
    %v1005 = vunpack.c.h.bf16 %v1000
    %v1006 = vunpack.c.l.bf16 %v1001
    %v1007 = vunpack.c.h.bf16 %v1001
    %v1008 = vunpack.c.l.bf16 %v1002
    %v1009 = vunpack.c.h.bf16 %v1002
    %v1010 = vunpack.c.l.bf16 %v1003
    %v1011 = vunpack.c.h.bf16 %v1003
    %vm1012 = vcmp.gt.f32.partialorder %v1004, 0.0
    %vm1013 = vcmp.gt.f32.partialorder %v1005, 0.0
    %vm1014 = vcmp.gt.f32.partialorder %v1006, 0.0
    %vm1015 = vcmp.gt.f32.partialorder %v1007, 0.0
    %vm1016 = vcmp.gt.f32.partialorder %v1008, 0.0
    %vm1017 = vcmp.gt.f32.partialorder %v1009, 0.0
    %vm1018 = vcmp.gt.f32.partialorder %v1010, 0.0
    %vm1019 = vcmp.gt.f32.partialorder %v1011, 0.0
    %v1020 = vmul.f32 %v1004, 0.010009766
    %v1021 = vmul.f32 %v1005, 0.010009766
    %v1022 = vmul.f32 %v1006, 0.010009766
    %v1023 = vmul.f32 %v1007, 0.010009766
    %v1024 = vmul.f32 %v1008, 0.010009766
    %v1025 = vmul.f32 %v1009, 0.010009766
    %v1026 = vmul.f32 %v1010, 0.010009766
    %v1027 = vmul.f32 %v1011, 0.010009766
    %v1028 = vpack.c.bf16 %v1021, %v1020
    %v1029 = vpack.c.bf16 %v1023, %v1022
    %v1030 = vpack.c.bf16 %v1025, %v1024
    %v1031 = vpack.c.bf16 %v1027, %v1026
    %vm1032 = vmpackc.low %vm1013, %vm1012
    %vm1033 = vmpackc.low %vm1015, %vm1014
    %vm1034 = vmpackc.low %vm1017, %vm1016
    %vm1035 = vmpackc.low %vm1019, %vm1018
    %v1036 = vsel %vm1032, %v1000, %v1028
    %v1037 = vsel %vm1033, %v1001, %v1029
    %v1038 = vsel %vm1034, %v1002, %v1030
    %v1039 = vsel %vm1035, %v1003, %v1031
    %v1040 = vld [vmem:[#allocation16] sm:$0xff]
    %v1041 = vld [vmem:[#allocation16 + $0x8] sm:$0xff]
    %v1042 = vld [vmem:[#allocation16 + $0x10] sm:$0xff]
    %v1043 = vld [vmem:[#allocation16 + $0x18] sm:$0xff]
    %v1044 = vld [vmem:[#allocation16 + $0x20] sm:$0xff]
    %v1045 = vld [vmem:[#allocation16 + $0x28] sm:$0xff]
    %v1046 = vld [vmem:[#allocation16 + $0x30] sm:$0xff]
    %v1047 = vld [vmem:[#allocation16 + $0x38] sm:$0xff]
    %v1048 = vld [vmem:[#allocation16 + $0x40] sm:$0xff]
    %v1049 = vld [vmem:[#allocation16 + $0x48] sm:$0xff]
    %v1050 = vld [vmem:[#allocation16 + $0x50] sm:$0xff]
    %v1051 = vld [vmem:[#allocation16 + $0x58] sm:$0xff]
    %v1052 = vld [vmem:[#allocation16 + $0x60] sm:$0xff]
    %v1053 = vld [vmem:[#allocation16 + $0x68] sm:$0xff]
    %v1054 = vld [vmem:[#allocation16 + $0x70] sm:$0xff]
    %v1055 = vld [vmem:[#allocation16 + $0x78] sm:$0xff]
    %v1056 = vld [vmem:[#allocation16 + $0x80] sm:$0xff]
    %v1057 = vld [vmem:[#allocation16 + $0x88] sm:$0xff]
    %v1058 = vld [vmem:[#allocation16 + $0x90] sm:$0xff]
    %v1059 = vld [vmem:[#allocation16 + $0x98] sm:$0xff]
    %v1060 = vld [vmem:[#allocation16 + $0xa0] sm:$0xff]
    %v1061 = vld [vmem:[#allocation16 + $0xa8] sm:$0xff]
    %v1062 = vld [vmem:[#allocation16 + $0xb0] sm:$0xff]
    %v1063 = vld [vmem:[#allocation16 + $0xb8] sm:$0xff]
    %v1064 = vld [vmem:[#allocation16 + $0xc0] sm:$0xff]
    %v1065 = vld [vmem:[#allocation16 + $0xc8] sm:$0xff]
    %v1066 = vld [vmem:[#allocation16 + $0xd0] sm:$0xff]
    %v1067 = vld [vmem:[#allocation16 + $0xd8] sm:$0xff]
    %v1068 = vld [vmem:[#allocation16 + $0xe0] sm:$0xff]
    %v1069 = vld [vmem:[#allocation16 + $0xe8] sm:$0xff]
    %v1070 = vld [vmem:[#allocation16 + $0xf0] sm:$0xff]
    %v1071 = vld [vmem:[#allocation16 + $0xf8] sm:$0xff]
    %v1072 = vld [vmem:[#allocation16 + $0x100] sm:$0xff]
    %v1073 = vld [vmem:[#allocation16 + $0x108] sm:$0xff]
    %v1074 = vld [vmem:[#allocation16 + $0x110] sm:$0xff]
    %v1075 = vld [vmem:[#allocation16 + $0x118] sm:$0xff]
    %v1076 = vld [vmem:[#allocation16 + $0x120] sm:$0xff]
    %v1077 = vld [vmem:[#allocation16 + $0x128] sm:$0xff]
    %v1078 = vld [vmem:[#allocation16 + $0x130] sm:$0xff]
    %v1079 = vld [vmem:[#allocation16 + $0x138] sm:$0xff]
    %v1080 = vld [vmem:[#allocation16 + $0x140] sm:$0xff]
    %v1081 = vld [vmem:[#allocation16 + $0x148] sm:$0xff]
    %v1082 = vld [vmem:[#allocation16 + $0x150] sm:$0xff]
    %v1083 = vld [vmem:[#allocation16 + $0x158] sm:$0xff]
    %v1084 = vld [vmem:[#allocation16 + $0x160] sm:$0xff]
    %v1085 = vld [vmem:[#allocation16 + $0x168] sm:$0xff]
    %v1086 = vld [vmem:[#allocation16 + $0x170] sm:$0xff]
    %v1087 = vld [vmem:[#allocation16 + $0x178] sm:$0xff]
    %v1088 = vld [vmem:[#allocation16 + $0x180] sm:$0xff]
    %v1089 = vld [vmem:[#allocation16 + $0x188] sm:$0xff]
    %v1090 = vld [vmem:[#allocation16 + $0x190] sm:$0xff]
    %v1091 = vld [vmem:[#allocation16 + $0x198] sm:$0xff]
    %v1092 = vld [vmem:[#allocation16 + $0x1a0] sm:$0xff]
    %v1093 = vld [vmem:[#allocation16 + $0x1a8] sm:$0xff]
    %v1094 = vld [vmem:[#allocation16 + $0x1b0] sm:$0xff]
    %v1095 = vld [vmem:[#allocation16 + $0x1b8] sm:$0xff]
    %v1096 = vld [vmem:[#allocation16 + $0x1c0] sm:$0xff]
    %v1097 = vld [vmem:[#allocation16 + $0x1c8] sm:$0xff]
    %v1098 = vld [vmem:[#allocation16 + $0x1d0] sm:$0xff]
    %v1099 = vld [vmem:[#allocation16 + $0x1d8] sm:$0xff]
    %v1100 = vld [vmem:[#allocation16 + $0x1e0] sm:$0xff]
    %v1101 = vld [vmem:[#allocation16 + $0x1e8] sm:$0xff]
    %v1102 = vld [vmem:[#allocation16 + $0x1f0] sm:$0xff]
    %v1103 = vld [vmem:[#allocation16 + $0x1f8] sm:$0xff]
    %v1104 = vld [vmem:[%s10] sm:$0x3]
    %v1106 = vperm.slane %v1104, 0
    %v1107 = vperm.slane %v1104, 1
    %v1114 = vunpack.c.l.b16 %v1036
    %v1115 = vunpack.c.h.b16 %v1036
    %v1116 = vunpack.c.l.b16 %v1037
    %v1117 = vunpack.c.h.b16 %v1037
    %v1118 = vunpack.c.l.b16 %v1038
    %v1119 = vunpack.c.h.b16 %v1038
    %v1120 = vunpack.c.l.b16 %v1039
    %v1121 = vunpack.c.h.b16 %v1039
    %v1122 = vpack.c.b16 %v1118, %v1114
    %v1123 = vpack.c.b16 %v1119, %v1115
    %v1124 = vpack.c.b16 %v1120, %v1116
    %v1125 = vpack.c.b16 %v1121, %v1117
    %v1194 = vunpack.c.l.b16 %v1040
    %v1195 = vunpack.c.h.b16 %v1040
    %v1196 = vunpack.c.l.b16 %v1041
    %v1197 = vunpack.c.h.b16 %v1041
    %v1198 = vunpack.c.l.b16 %v1042
    %v1199 = vunpack.c.h.b16 %v1042
    %v1200 = vunpack.c.l.b16 %v1043
    %v1201 = vunpack.c.h.b16 %v1043
    %v1202 = vunpack.c.l.b16 %v1044
    %v1203 = vunpack.c.h.b16 %v1044
    %v1204 = vunpack.c.l.b16 %v1045
    %v1205 = vunpack.c.h.b16 %v1045
    %v1206 = vunpack.c.l.b16 %v1046
    %v1207 = vunpack.c.h.b16 %v1046
    %v1208 = vunpack.c.l.b16 %v1047
    %v1209 = vunpack.c.h.b16 %v1047
    %v1210 = vunpack.c.l.b16 %v1048
    %v1211 = vunpack.c.h.b16 %v1048
    %v1212 = vunpack.c.l.b16 %v1049
    %v1213 = vunpack.c.h.b16 %v1049
    %v1214 = vunpack.c.l.b16 %v1050
    %v1215 = vunpack.c.h.b16 %v1050
    %v1216 = vunpack.c.l.b16 %v1051
    %v1217 = vunpack.c.h.b16 %v1051
    %v1218 = vunpack.c.l.b16 %v1052
    %v1219 = vunpack.c.h.b16 %v1052
    %v1220 = vunpack.c.l.b16 %v1053
    %v1221 = vunpack.c.h.b16 %v1053
    %v1222 = vunpack.c.l.b16 %v1054
    %v1223 = vunpack.c.h.b16 %v1054
    %v1224 = vunpack.c.l.b16 %v1055
    %v1225 = vunpack.c.h.b16 %v1055
    %v1226 = vunpack.c.l.b16 %v1056
    %v1227 = vunpack.c.h.b16 %v1056
    %v1228 = vunpack.c.l.b16 %v1057
    %v1229 = vunpack.c.h.b16 %v1057
    %v1230 = vunpack.c.l.b16 %v1058
    %v1231 = vunpack.c.h.b16 %v1058
    %v1232 = vunpack.c.l.b16 %v1059
    %v1233 = vunpack.c.h.b16 %v1059
    %v1234 = vunpack.c.l.b16 %v1060
    %v1235 = vunpack.c.h.b16 %v1060
    %v1236 = vunpack.c.l.b16 %v1061
    %v1237 = vunpack.c.h.b16 %v1061
    %v1238 = vunpack.c.l.b16 %v1062
    %v1239 = vunpack.c.h.b16 %v1062
    %v1240 = vunpack.c.l.b16 %v1063
    %v1241 = vunpack.c.h.b16 %v1063
    %v1242 = vunpack.c.l.b16 %v1064
    %v1243 = vunpack.c.h.b16 %v1064
    %v1244 = vunpack.c.l.b16 %v1065
    %v1245 = vunpack.c.h.b16 %v1065
    %v1246 = vunpack.c.l.b16 %v1066
    %v1247 = vunpack.c.h.b16 %v1066
    %v1248 = vunpack.c.l.b16 %v1067
    %v1249 = vunpack.c.h.b16 %v1067
    %v1250 = vunpack.c.l.b16 %v1068
    %v1251 = vunpack.c.h.b16 %v1068
    %v1252 = vunpack.c.l.b16 %v1069
    %v1253 = vunpack.c.h.b16 %v1069
    %v1254 = vunpack.c.l.b16 %v1070
    %v1255 = vunpack.c.h.b16 %v1070
    %v1256 = vunpack.c.l.b16 %v1071
    %v1257 = vunpack.c.h.b16 %v1071
    %v1258 = vunpack.c.l.b16 %v1072
    %v1259 = vunpack.c.h.b16 %v1072
    %v1260 = vunpack.c.l.b16 %v1073
    %v1261 = vunpack.c.h.b16 %v1073
    %v1262 = vunpack.c.l.b16 %v1074
    %v1263 = vunpack.c.h.b16 %v1074
    %v1264 = vunpack.c.l.b16 %v1075
    %v1265 = vunpack.c.h.b16 %v1075
    %v1266 = vunpack.c.l.b16 %v1076
    %v1267 = vunpack.c.h.b16 %v1076
    %v1268 = vunpack.c.l.b16 %v1077
    %v1269 = vunpack.c.h.b16 %v1077
    %v1270 = vunpack.c.l.b16 %v1078
    %v1271 = vunpack.c.h.b16 %v1078
    %v1272 = vunpack.c.l.b16 %v1079
    %v1273 = vunpack.c.h.b16 %v1079
    %v1274 = vunpack.c.l.b16 %v1080
    %v1275 = vunpack.c.h.b16 %v1080
    %v1276 = vunpack.c.l.b16 %v1081
    %v1277 = vunpack.c.h.b16 %v1081
    %v1278 = vunpack.c.l.b16 %v1082
    %v1279 = vunpack.c.h.b16 %v1082
    %v1280 = vunpack.c.l.b16 %v1083
    %v1281 = vunpack.c.h.b16 %v1083
    %v1282 = vunpack.c.l.b16 %v1084
    %v1283 = vunpack.c.h.b16 %v1084
    %v1284 = vunpack.c.l.b16 %v1085
    %v1285 = vunpack.c.h.b16 %v1085
    %v1286 = vunpack.c.l.b16 %v1086
    %v1287 = vunpack.c.h.b16 %v1086
    %v1288 = vunpack.c.l.b16 %v1087
    %v1289 = vunpack.c.h.b16 %v1087
    %v1290 = vunpack.c.l.b16 %v1088
    %v1291 = vunpack.c.h.b16 %v1088
    %v1292 = vunpack.c.l.b16 %v1089
    %v1293 = vunpack.c.h.b16 %v1089
    %v1294 = vunpack.c.l.b16 %v1090
    %v1295 = vunpack.c.h.b16 %v1090
    %v1296 = vunpack.c.l.b16 %v1091
    %v1297 = vunpack.c.h.b16 %v1091
    %v1298 = vunpack.c.l.b16 %v1092
    %v1299 = vunpack.c.h.b16 %v1092
    %v1300 = vunpack.c.l.b16 %v1093
    %v1301 = vunpack.c.h.b16 %v1093
    %v1302 = vunpack.c.l.b16 %v1094
    %v1303 = vunpack.c.h.b16 %v1094
    %v1304 = vunpack.c.l.b16 %v1095
    %v1305 = vunpack.c.h.b16 %v1095
    %v1306 = vunpack.c.l.b16 %v1096
    %v1307 = vunpack.c.h.b16 %v1096
    %v1308 = vunpack.c.l.b16 %v1097
    %v1309 = vunpack.c.h.b16 %v1097
    %v1310 = vunpack.c.l.b16 %v1098
    %v1311 = vunpack.c.h.b16 %v1098
    %v1312 = vunpack.c.l.b16 %v1099
    %v1313 = vunpack.c.h.b16 %v1099
    %v1314 = vunpack.c.l.b16 %v1100
    %v1315 = vunpack.c.h.b16 %v1100
    %v1316 = vunpack.c.l.b16 %v1101
    %v1317 = vunpack.c.h.b16 %v1101
    %v1318 = vunpack.c.l.b16 %v1102
    %v1319 = vunpack.c.h.b16 %v1102
    %v1320 = vunpack.c.l.b16 %v1103
    %v1321 = vunpack.c.h.b16 %v1103
    %v1322 = vpack.c.b16 %v1196, %v1194
    %v1323 = vpack.c.b16 %v1197, %v1195
    %v1324 = vpack.c.b16 %v1200, %v1198
    %v1325 = vpack.c.b16 %v1201, %v1199
    %v1326 = vpack.c.b16 %v1204, %v1202
    %v1327 = vpack.c.b16 %v1205, %v1203
    %v1328 = vpack.c.b16 %v1208, %v1206
    %v1329 = vpack.c.b16 %v1209, %v1207
    %v1330 = vpack.c.b16 %v1212, %v1210
    %v1331 = vpack.c.b16 %v1213, %v1211
    %v1332 = vpack.c.b16 %v1216, %v1214
    %v1333 = vpack.c.b16 %v1217, %v1215
    %v1334 = vpack.c.b16 %v1220, %v1218
    %v1335 = vpack.c.b16 %v1221, %v1219
    %v1336 = vpack.c.b16 %v1224, %v1222
    %v1337 = vpack.c.b16 %v1225, %v1223
    %v1338 = vpack.c.b16 %v1228, %v1226
    %v1339 = vpack.c.b16 %v1229, %v1227
    %v1340 = vpack.c.b16 %v1232, %v1230
    %v1341 = vpack.c.b16 %v1233, %v1231
    %v1342 = vpack.c.b16 %v1236, %v1234
    %v1343 = vpack.c.b16 %v1237, %v1235
    %v1344 = vpack.c.b16 %v1240, %v1238
    %v1345 = vpack.c.b16 %v1241, %v1239
    %v1346 = vpack.c.b16 %v1244, %v1242
    %v1347 = vpack.c.b16 %v1245, %v1243
    %v1348 = vpack.c.b16 %v1248, %v1246
    %v1349 = vpack.c.b16 %v1249, %v1247
    %v1350 = vpack.c.b16 %v1252, %v1250
    %v1351 = vpack.c.b16 %v1253, %v1251
    %v1352 = vpack.c.b16 %v1256, %v1254
    %v1353 = vpack.c.b16 %v1257, %v1255
    %v1354 = vpack.c.b16 %v1260, %v1258
    %v1355 = vpack.c.b16 %v1261, %v1259
    %v1356 = vpack.c.b16 %v1264, %v1262
    %v1357 = vpack.c.b16 %v1265, %v1263
    %v1358 = vpack.c.b16 %v1268, %v1266
    %v1359 = vpack.c.b16 %v1269, %v1267
    %v1360 = vpack.c.b16 %v1272, %v1270
    %v1361 = vpack.c.b16 %v1273, %v1271
    %v1362 = vpack.c.b16 %v1276, %v1274
    %v1363 = vpack.c.b16 %v1277, %v1275
    %v1364 = vpack.c.b16 %v1280, %v1278
    %v1365 = vpack.c.b16 %v1281, %v1279
    %v1366 = vpack.c.b16 %v1284, %v1282
    %v1367 = vpack.c.b16 %v1285, %v1283
    %v1368 = vpack.c.b16 %v1288, %v1286
    %v1369 = vpack.c.b16 %v1289, %v1287
    %v1370 = vpack.c.b16 %v1292, %v1290
    %v1371 = vpack.c.b16 %v1293, %v1291
    %v1372 = vpack.c.b16 %v1296, %v1294
    %v1373 = vpack.c.b16 %v1297, %v1295
    %v1374 = vpack.c.b16 %v1300, %v1298
    %v1375 = vpack.c.b16 %v1301, %v1299
    %v1376 = vpack.c.b16 %v1304, %v1302
    %v1377 = vpack.c.b16 %v1305, %v1303
    %v1378 = vpack.c.b16 %v1308, %v1306
    %v1379 = vpack.c.b16 %v1309, %v1307
    %v1380 = vpack.c.b16 %v1312, %v1310
    %v1381 = vpack.c.b16 %v1313, %v1311
    %v1382 = vpack.c.b16 %v1316, %v1314
    %v1383 = vpack.c.b16 %v1317, %v1315
    %v1384 = vpack.c.b16 %v1320, %v1318
    %v1385 = vpack.c.b16 %v1321, %v1319
    %1450 = vmatpush.bf16.msra.mxu0 %v1336
    %1451 = vmatpush.bf16.msra.mxu0 %v1334
    %1452 = vmatpush.bf16.msra.mxu0 %v1332
    %1453 = vmatpush.bf16.msra.mxu0 %v1330
    %1454 = vmatpush.bf16.msra.mxu0 %v1328
    %1455 = vmatpush.bf16.msra.mxu0 %v1326
    %1456 = vmatpush.bf16.msra.mxu0 %v1324
    %1457 = vmatpush.bf16.msra.mxu0 %v1322
    %1458 = vmatmul.bf16.gmra.mxu0 %v1122
    %v1459 = vpop.f32.mrf.mxu0
    %v1460 = vadd.f32 %v1106, %v1459
    %v1461 = vpop.f32.mrf.mxu0
    %v1462 = vadd.f32 %v1106, %v1461
    %1463 = vdwg.mxu0
    %1464 = vmatpush.bf16.msra.mxu0 %v1352
    %1465 = vmatpush.bf16.msra.mxu0 %v1350
    %1466 = vmatpush.bf16.msra.mxu0 %v1348
    %1467 = vmatpush.bf16.msra.mxu0 %v1346
    %1468 = vmatpush.bf16.msra.mxu0 %v1344
    %1469 = vmatpush.bf16.msra.mxu0 %v1342
    %1470 = vmatpush.bf16.msra.mxu0 %v1340
    %1471 = vmatpush.bf16.msra.mxu0 %v1338
    %1472 = vmatmul.bf16.gmra.mxu0 %v1123
    %v1473 = vpop.f32.mrf.mxu0
    %v1474 = vadd.f32 %v1460, %v1473
    %v1475 = vpop.f32.mrf.mxu0
    %v1476 = vadd.f32 %v1462, %v1475
    %1477 = vdwg.mxu0
    %1478 = vmatpush.bf16.msra.mxu0 %v1368
    %1479 = vmatpush.bf16.msra.mxu0 %v1366
    %1480 = vmatpush.bf16.msra.mxu0 %v1364
    %1481 = vmatpush.bf16.msra.mxu0 %v1362
    %1482 = vmatpush.bf16.msra.mxu0 %v1360
    %1483 = vmatpush.bf16.msra.mxu0 %v1358
    %1484 = vmatpush.bf16.msra.mxu0 %v1356
    %1485 = vmatpush.bf16.msra.mxu0 %v1354
    %1486 = vmatmul.bf16.gmra.mxu0 %v1124
    %v1487 = vpop.f32.mrf.mxu0
    %v1488 = vadd.f32 %v1474, %v1487
    %v1489 = vpop.f32.mrf.mxu0
    %v1490 = vadd.f32 %v1476, %v1489
    %1491 = vdwg.mxu0
    %1492 = vmatpush.bf16.msra.mxu0 %v1384
    %1493 = vmatpush.bf16.msra.mxu0 %v1382
    %1494 = vmatpush.bf16.msra.mxu0 %v1380
    %1495 = vmatpush.bf16.msra.mxu0 %v1378
    %1496 = vmatpush.bf16.msra.mxu0 %v1376
    %1497 = vmatpush.bf16.msra.mxu0 %v1374
    %1498 = vmatpush.bf16.msra.mxu0 %v1372
    %1499 = vmatpush.bf16.msra.mxu0 %v1370
    %1500 = vmatmul.bf16.gmra.mxu0 %v1125
    %v1501 = vpop.f32.mrf.mxu0
    %v1502 = vadd.f32 %v1488, %v1501
    %v1503 = vpop.f32.mrf.mxu0
    %v1504 = vadd.f32 %v1490, %v1503
    %1505 = vdwg.mxu0
    %1506 = vmatpush.bf16.msra.mxu0 %v1337
    %1507 = vmatpush.bf16.msra.mxu0 %v1335
    %1508 = vmatpush.bf16.msra.mxu0 %v1333
    %1509 = vmatpush.bf16.msra.mxu0 %v1331
    %1510 = vmatpush.bf16.msra.mxu0 %v1329
    %1511 = vmatpush.bf16.msra.mxu0 %v1327
    %1512 = vmatpush.bf16.msra.mxu0 %v1325
    %1513 = vmatpush.bf16.msra.mxu0 %v1323
    %1514 = vmatmul.bf16.gmra.mxu0 %v1122
    %v1515 = vpop.f32.mrf.mxu0
    %v1516 = vadd.f32 %v1107, %v1515
    %v1517 = vpop.f32.mrf.mxu0
    %v1518 = vadd.f32 %v1107, %v1517
    %1519 = vdwg.mxu0
    %1520 = vmatpush.bf16.msra.mxu0 %v1353
    %1521 = vmatpush.bf16.msra.mxu0 %v1351
    %1522 = vmatpush.bf16.msra.mxu0 %v1349
    %1523 = vmatpush.bf16.msra.mxu0 %v1347
    %1524 = vmatpush.bf16.msra.mxu0 %v1345
    %1525 = vmatpush.bf16.msra.mxu0 %v1343
    %1526 = vmatpush.bf16.msra.mxu0 %v1341
    %1527 = vmatpush.bf16.msra.mxu0 %v1339
    %1528 = vmatmul.bf16.gmra.mxu0 %v1123
    %v1529 = vpop.f32.mrf.mxu0
    %v1530 = vadd.f32 %v1516, %v1529
    %v1531 = vpop.f32.mrf.mxu0
    %v1532 = vadd.f32 %v1518, %v1531
    %1533 = vdwg.mxu0
    %1534 = vmatpush.bf16.msra.mxu0 %v1369
    %1535 = vmatpush.bf16.msra.mxu0 %v1367
    %1536 = vmatpush.bf16.msra.mxu0 %v1365
    %1537 = vmatpush.bf16.msra.mxu0 %v1363
    %1538 = vmatpush.bf16.msra.mxu0 %v1361
    %1539 = vmatpush.bf16.msra.mxu0 %v1359
    %1540 = vmatpush.bf16.msra.mxu0 %v1357
    %1541 = vmatpush.bf16.msra.mxu0 %v1355
    %1542 = vmatmul.bf16.gmra.mxu0 %v1124
    %v1543 = vpop.f32.mrf.mxu0
    %v1544 = vadd.f32 %v1530, %v1543
    %v1545 = vpop.f32.mrf.mxu0
    %v1546 = vadd.f32 %v1532, %v1545
    %1547 = vdwg.mxu0
    %1548 = vmatpush.bf16.msra.mxu0 %v1385
    %1549 = vmatpush.bf16.msra.mxu0 %v1383
    %1550 = vmatpush.bf16.msra.mxu0 %v1381
    %1551 = vmatpush.bf16.msra.mxu0 %v1379
    %1552 = vmatpush.bf16.msra.mxu0 %v1377
    %1553 = vmatpush.bf16.msra.mxu0 %v1375
    %1554 = vmatpush.bf16.msra.mxu0 %v1373
    %1555 = vmatpush.bf16.msra.mxu0 %v1371
    %1556 = vmatmul.bf16.gmra.mxu0 %v1125
    %v1557 = vpop.f32.mrf.mxu0
    %v1558 = vadd.f32 %v1544, %v1557
    %v1559 = vpop.f32.mrf.mxu0
    %v1560 = vadd.f32 %v1546, %v1559
    %1561 = vdwg.mxu0
    %v1562 = vpack.c.bf16 %v1558, %v1502
    %v1563 = vpack.c.bf16 %v1560, %v1504
    %v1564 = vunpack.c.l.bf16 %v1562
    %v1565 = vunpack.c.h.bf16 %v1562
    %v1566 = vunpack.c.l.bf16 %v1563
    %v1567 = vunpack.c.h.bf16 %v1563
    %vm1568 = vcmp.gt.f32.partialorder %v1564, 0.0
    %vm1569 = vcmp.gt.f32.partialorder %v1565, 0.0
    %vm1570 = vcmp.gt.f32.partialorder %v1566, 0.0
    %vm1571 = vcmp.gt.f32.partialorder %v1567, 0.0
    %v1572 = vmul.f32 %v1564, 0.010009766
    %v1573 = vmul.f32 %v1565, 0.010009766
    %v1574 = vmul.f32 %v1566, 0.010009766
    %v1575 = vmul.f32 %v1567, 0.010009766
    %v1576 = vpack.c.bf16 %v1573, %v1572
    %v1577 = vpack.c.bf16 %v1575, %v1574
    %vm1578 = vmpackc.low %vm1569, %vm1568
    %vm1579 = vmpackc.low %vm1571, %vm1570
    %v1580 = vsel %vm1578, %v1562, %v1576
    %v1581 = vsel %vm1579, %v1563, %v1577
    %v1582 = vld [vmem:[#allocation17] sm:$0xf]
    %v1583 = vld [vmem:[#allocation17 + $0x4] sm:$0xf]
    %v1584 = vld [vmem:[#allocation17 + $0x8] sm:$0xf]
    %v1585 = vld [vmem:[#allocation17 + $0xc] sm:$0xf]
    %v1586 = vld [vmem:[#allocation17 + $0x10] sm:$0xf]
    %v1587 = vld [vmem:[#allocation17 + $0x14] sm:$0xf]
    %v1588 = vld [vmem:[#allocation17 + $0x18] sm:$0xf]
    %v1589 = vld [vmem:[#allocation17 + $0x1c] sm:$0xf]
    %v1590 = vld [vmem:[#allocation17 + $0x20] sm:$0xf]
    %v1591 = vld [vmem:[#allocation17 + $0x24] sm:$0xf]
    %v1592 = vld [vmem:[#allocation17 + $0x28] sm:$0xf]
    %v1593 = vld [vmem:[#allocation17 + $0x2c] sm:$0xf]
    %v1594 = vld [vmem:[#allocation17 + $0x30] sm:$0xf]
    %v1595 = vld [vmem:[#allocation17 + $0x34] sm:$0xf]
    %v1596 = vld [vmem:[#allocation17 + $0x38] sm:$0xf]
    %v1597 = vld [vmem:[#allocation17 + $0x3c] sm:$0xf]
    %v1598 = vld [vmem:[#allocation17 + $0x40] sm:$0xf]
    %v1599 = vld [vmem:[#allocation17 + $0x44] sm:$0xf]
    %v1600 = vld [vmem:[#allocation17 + $0x48] sm:$0xf]
    %v1601 = vld [vmem:[#allocation17 + $0x4c] sm:$0xf]
    %v1602 = vld [vmem:[#allocation17 + $0x50] sm:$0xf]
    %v1603 = vld [vmem:[#allocation17 + $0x54] sm:$0xf]
    %v1604 = vld [vmem:[#allocation17 + $0x58] sm:$0xf]
    %v1605 = vld [vmem:[#allocation17 + $0x5c] sm:$0xf]
    %v1606 = vld [vmem:[#allocation17 + $0x60] sm:$0xf]
    %v1607 = vld [vmem:[#allocation17 + $0x64] sm:$0xf]
    %v1608 = vld [vmem:[#allocation17 + $0x68] sm:$0xf]
    %v1609 = vld [vmem:[#allocation17 + $0x6c] sm:$0xf]
    %v1610 = vld [vmem:[#allocation17 + $0x70] sm:$0xf]
    %v1611 = vld [vmem:[#allocation17 + $0x74] sm:$0xf]
    %v1612 = vld [vmem:[#allocation17 + $0x78] sm:$0xf]
    %v1613 = vld [vmem:[#allocation17 + $0x7c] sm:$0xf]
    %v1614 = vld [vmem:[%s12] sm:$0x1]
    %v1616 = vperm.slane %v1614, 0
    %v1620 = vunpack.c.l.b16 %v1580
    %v1621 = vunpack.c.h.b16 %v1580
    %v1622 = vunpack.c.l.b16 %v1581
    %v1623 = vunpack.c.h.b16 %v1581
    %v1624 = vpack.c.b16 %v1622, %v1620
    %v1625 = vpack.c.b16 %v1623, %v1621
    %v1660 = vunpack.c.l.b16 %v1582
    %v1661 = vunpack.c.l.b16 %v1583
    %v1662 = vunpack.c.l.b16 %v1584
    %v1663 = vunpack.c.l.b16 %v1585
    %v1664 = vunpack.c.l.b16 %v1586
    %v1665 = vunpack.c.l.b16 %v1587
    %v1666 = vunpack.c.l.b16 %v1588
    %v1667 = vunpack.c.l.b16 %v1589
    %v1668 = vunpack.c.l.b16 %v1590
    %v1669 = vunpack.c.l.b16 %v1591
    %v1670 = vunpack.c.l.b16 %v1592
    %v1671 = vunpack.c.l.b16 %v1593
    %v1672 = vunpack.c.l.b16 %v1594
    %v1673 = vunpack.c.l.b16 %v1595
    %v1674 = vunpack.c.l.b16 %v1596
    %v1675 = vunpack.c.l.b16 %v1597
    %v1676 = vunpack.c.l.b16 %v1598
    %v1677 = vunpack.c.l.b16 %v1599
    %v1678 = vunpack.c.l.b16 %v1600
    %v1679 = vunpack.c.l.b16 %v1601
    %v1680 = vunpack.c.l.b16 %v1602
    %v1681 = vunpack.c.l.b16 %v1603
    %v1682 = vunpack.c.l.b16 %v1604
    %v1683 = vunpack.c.l.b16 %v1605
    %v1684 = vunpack.c.l.b16 %v1606
    %v1685 = vunpack.c.l.b16 %v1607
    %v1686 = vunpack.c.l.b16 %v1608
    %v1687 = vunpack.c.l.b16 %v1609
    %v1688 = vunpack.c.l.b16 %v1610
    %v1689 = vunpack.c.l.b16 %v1611
    %v1690 = vunpack.c.l.b16 %v1612
    %v1691 = vunpack.c.l.b16 %v1613
    %v1692 = vpack.c.b16 %v1661, %v1660
    %v1693 = vpack.c.b16 %v1663, %v1662
    %v1694 = vpack.c.b16 %v1665, %v1664
    %v1695 = vpack.c.b16 %v1667, %v1666
    %v1696 = vpack.c.b16 %v1669, %v1668
    %v1697 = vpack.c.b16 %v1671, %v1670
    %v1698 = vpack.c.b16 %v1673, %v1672
    %v1699 = vpack.c.b16 %v1675, %v1674
    %v1700 = vpack.c.b16 %v1677, %v1676
    %v1701 = vpack.c.b16 %v1679, %v1678
    %v1702 = vpack.c.b16 %v1681, %v1680
    %v1703 = vpack.c.b16 %v1683, %v1682
    %v1704 = vpack.c.b16 %v1685, %v1684
    %v1705 = vpack.c.b16 %v1687, %v1686
    %v1706 = vpack.c.b16 %v1689, %v1688
    %v1707 = vpack.c.b16 %v1691, %v1690
    %1724 = vmatpush.bf16.msra.mxu0 %v1699
    %1725 = vmatpush.bf16.msra.mxu0 %v1698
    %1726 = vmatpush.bf16.msra.mxu0 %v1697
    %1727 = vmatpush.bf16.msra.mxu0 %v1696
    %1728 = vmatpush.bf16.msra.mxu0 %v1695
    %1729 = vmatpush.bf16.msra.mxu0 %v1694
    %1730 = vmatpush.bf16.msra.mxu0 %v1693
    %1731 = vmatpush.bf16.msra.mxu0 %v1692
    %1732 = vmatmul.bf16.gmra.mxu0 %v1624
    %v1733 = vpop.f32.mrf.mxu0
    %v1734 = vadd.f32 %v1616, %v1733
    %v1735 = vpop.f32.mrf.mxu0
    %v1736 = vadd.f32 %v1616, %v1735
    %1737 = vdwg.mxu0
    %1738 = vmatpush.bf16.msra.mxu0 %v1707
    %1739 = vmatpush.bf16.msra.mxu0 %v1706
    %1740 = vmatpush.bf16.msra.mxu0 %v1705
    %1741 = vmatpush.bf16.msra.mxu0 %v1704
    %1742 = vmatpush.bf16.msra.mxu0 %v1703
    %1743 = vmatpush.bf16.msra.mxu0 %v1702
    %1744 = vmatpush.bf16.msra.mxu0 %v1701
    %1745 = vmatpush.bf16.msra.mxu0 %v1700
    %1746 = vmatmul.bf16.gmra.mxu0 %v1625
    %v1747 = vpop.f32.mrf.mxu0
    %v1748 = vadd.f32 %v1734, %v1747
    %v1749 = vpop.f32.mrf.mxu0
    %v1750 = vadd.f32 %v1736, %v1749
    %1751 = vdwg.mxu0
    %v1752 = vpack.c.bf16 %v1748, %v1748
    %v1753 = vpack.c.bf16 %v1750, %v1750
    %v1754 = vunpack.c.l.bf16 %v1752
    %v1755 = vunpack.c.l.bf16 %v1753
    %vm1756 = vcmp.gt.f32.partialorder %v1754, 0.0
    %vm1757 = vcmp.gt.f32.partialorder %v1755, 0.0
    %v1758 = vmul.f32 %v1754, 0.010009766
    %v1759 = vmul.f32 %v1755, 0.010009766
    %v1760 = vpack.c.bf16 %v1758, %v1758
    %v1761 = vpack.c.bf16 %v1759, %v1759
    %vm1762 = vmpackc.low %vm1756, %vm1756
    %vm1763 = vmpackc.low %vm1757, %vm1757
    %v1764 = vsel %vm1762, %v1752, %v1760
    %v1765 = vsel %vm1763, %v1753, %v1761
    %v1766 = vld [vmem:[%s13] sm:$0xf]
    %v1767 = vld [vmem:[%s13 + $0x4] sm:$0xf]
    %v1768 = vld [vmem:[%s14] sm:$0xff]
    %v1769 = vld [vmem:[%s14 + $0x8] sm:$0xff]
    %1771 = vset.pattern.permute.xlu0 0
    %1772 = vperm.xlu0 %1771, %v1768
    %v1773 = vpop.permute.xlu0 %1772
    %1776 = vset.pattern.permute.xlu0 0
    %1777 = vperm.xlu0 %1776, %v1769
    %v1778 = vpop.permute.xlu0 %1777
    %v1782 = vunpack.c.l.b16 %v1766
    %v1783 = vunpack.c.l.b16 %v1767
    %v1784 = vpack.c.b16 %v1783, %v1782
    %v1788 = vunpack.c.l.b16 %v1764
    %v1789 = vunpack.c.l.b16 %v1765
    %v1790 = vpack.c.b16 %v1789, %v1788
    %1792 = vmatpush.bf16.xpose.msra.mxu0 0
    %1793 = vmatpush.bf16.xpose.msra.mxu0 0
    %1794 = vmatpush.bf16.xpose.msra.mxu0 0
    %1795 = vmatpush.bf16.xpose.msra.mxu0 0
    %1796 = vmatpush.bf16.xpose.msra.mxu0 0
    %1797 = vmatpush.bf16.xpose.msra.mxu0 0
    %1798 = vmatpush.bf16.xpose.msra.mxu0 0
    %1799 = vmatpush.bf16.xpose.msra.mxu0 %v1790
    %1800 = vmatmul.bf16.gmra.mxu0 %v1784
    %v1801 = vpop.f32.mrf.mxu0
    %v1802 = vadd.f32 %v1773, %v1801
    %v1803 = vpop.f32.mrf.mxu0
    %v1804 = vadd.f32 %v1778, %v1803
    %1805 = vdwg.mxu0
    %vm1806 = vcmask 130048
    %1807 = vst.msk [vmem:[#allocation19] sm:$0xff] %vm1806, %v1802
    %1808 = vst.msk [vmem:[#allocation19 + $0x8] sm:$0xff] %vm1806, %v1804
    // Predicated region
    $region102: #{tpu_custom_call.1} parent=1 // pred_check
      _
    $region103: #{tpu_custom_call.1} parent=1 // pred_check_branch
      %1810 = sbr.rel (0) target = $region105
    $region104: #{tpu_custom_call.1} parent=1 // pred_region
      %1812 = vsyncadd [#allocation4], 0
      %s1813 = sshll.u32 [#allocation19], 4
      %s1814 = int_to_ptr.vmem [resolvable:$true] %s1813
      %s1815 = sshll.u32 %s15, 4
      %s1816 = int_to_ptr.hbm [resolvable:$true] %s1815
      %1821 = dma.vmem_to_hbm [thread:$0]  %s1814, 256, %s1816, [#allocation4], 128, 128, 8
    $region105: #{tpu_custom_call.1} parent=1 // pred_fallthru
      _
    // Predicated region
    $region106: #{tpu_custom_call.1} parent=1 // pred_check
      _
    $region107: #{tpu_custom_call.1} parent=1 // pred_check_branch
      %1823 = sbr.rel (0) target = $region109
    $region108: #{tpu_custom_call.1} parent=1 // pred_region
      %1825 = dma.done [#allocation4], 256
    $region109: #{tpu_custom_call.1} parent=1 // pred_fallthru
      _
    %1826 = vsyncpa [#allocation3], 1
    %1827 = vsyncpa [#allocation6], 1
    %1828 = vsyncpa [#allocation9], 1
    %1829 = vsyncpa [#allocation12], 1
    %1830 = vsyncpa [#allocation15], 1
    %1831 = vsyncpa [#allocation18], 1
    %1832 = vsyncpa [#allocation4], 1

</llo_original>
